<compile_context>
chip_gen: v5e
topology: v5e:2x2
jax: 0.10.0
libtpu: 0.0.40
codegen_flags: <defaults>
</compile_context>

<pallas_src>
import jax
import jax.numpy as jnp
from jax.experimental import pallas as pl
from jax.experimental.pallas import tpu as pltpu

# Set to jnp.bfloat16 on v6e/v7x for ~2x MXU throughput and half the patch DMA
# bytes; accumulation and the bias/relu/pool epilogue stay f32 regardless.
MXU_DTYPE = jnp.float32

_LANE = 128
_TILE_M_MAX = 512          # lane-tile of the conv output grid (multiple of 128)
_VMEM_LIMIT = 32 * 1024 * 1024


def _round_up(x, m):
    return (x + m - 1) // m * m


# ----------------------------- Pallas kernels ------------------------------ #

def _conv_pool_kernel(p_ref, w_ref, b_ref, o_ref):
    """Fused conv + bias + ReLU + 2x2/stride-2 max-pool.

    p_ref: (4, K, TM) patch matrices, one per pool offset (dh, dw).
    w_ref: (Cout_pad, K), b_ref: (Cout_pad, 1), o_ref: (Cout_pad, TM).
    relu(max_d(W @ P_d) + b) == max-pooled relu(conv + b).
    """
    w = w_ref[...]
    acc = jnp.dot(w, p_ref[0], preferred_element_type=jnp.float32)
    for d in range(1, 4):
        acc = jnp.maximum(
            acc, jnp.dot(w, p_ref[d], preferred_element_type=jnp.float32))
    o_ref[...] = jnp.maximum(acc + b_ref[...], 0.0).astype(o_ref.dtype)


def _fc_chain_kernel(x_ref, w1_ref, b1_ref, w2_ref, b2_ref, w3_ref, b3_ref,
                     o_ref):
    """fc1-relu -> fc2-relu -> fc3, fully resident in VMEM (padded to 128 lanes)."""
    x = x_ref[...]
    h = jnp.dot(x, w1_ref[...], preferred_element_type=jnp.float32) + b1_ref[...]
    h = jnp.maximum(h, 0.0)
    h = jnp.dot(h.astype(w2_ref.dtype), w2_ref[...],
                preferred_element_type=jnp.float32) + b2_ref[...]
    h = jnp.maximum(h, 0.0)
    h = jnp.dot(h.astype(w3_ref.dtype), w3_ref[...],
                preferred_element_type=jnp.float32) + b3_ref[...]
    o_ref[...] = h.astype(o_ref.dtype)


# ------------------------------ layer wrappers ------------------------------ #

def conv_relu_pool(x_cnhw, w_mat, b_col, kh, kw):
    """x: (Cin, N, H, W) f32; w_mat: (Cout_pad, Cin*kh*kw); b_col: (Cout_pad, 1).

    Returns the ReLU'd, 2x2-max-pooled activation as (Cout_pad, N, Hp, Wp) f32.
    """
    Cin, N, H, W = x_cnhw.shape
    Ho, Wo = H - kh + 1, W - kw + 1
    Hp, Wp = Ho // 2, Wo // 2
    Cout_pad, K = w_mat.shape
    assert K == Cin * kh * kw
    Mp = N * Hp * Wp

    # Pool-decomposed, transposed im2col (XLA glue):
    #   patches[dh*2+dw, ci*kh*kw + i*kw + j, n*Hp*Wp + hp*Wp + wp]
    #     = x[ci, n, 2*hp+dh+i, 2*wp+dw+j]
    taps = []
    for dh in range(2):
        for dw in range(2):
            cols = [x_cnhw[:, :, dh + i::2, dw + j::2][:, :, :Hp, :Wp]
                    for i in range(kh) for j in range(kw)]
            tap = jnp.stack(cols, axis=1)              # (Cin, kh*kw, N, Hp, Wp)
            taps.append(tap.reshape(K, Mp))
    patches = jnp.stack(taps, axis=0)                  # (4, K, Mp)

    tile_m = _TILE_M_MAX if Mp >= _TILE_M_MAX else _round_up(Mp, _LANE)
    mp_pad = _round_up(Mp, tile_m)
    patches = jnp.pad(patches, ((0, 0), (0, 0), (0, mp_pad - Mp)))
    patches = patches.astype(MXU_DTYPE)

    out = pl.pallas_call(
        _conv_pool_kernel,
        out_shape=jax.ShapeDtypeStruct((Cout_pad, mp_pad), jnp.float32),
        grid=(mp_pad // tile_m,),
        in_specs=[
            pl.BlockSpec((4, K, tile_m), lambda i: (0, 0, i)),
            pl.BlockSpec((Cout_pad, K), lambda i: (0, 0)),
            pl.BlockSpec((Cout_pad, 1), lambda i: (0, 0)),
        ],
        out_specs=pl.BlockSpec((Cout_pad, tile_m), lambda i: (0, i)),
        compiler_params=pltpu.CompilerParams(
            dimension_semantics=("parallel",),
            vmem_limit_bytes=_VMEM_LIMIT),
    )(patches, w_mat.astype(MXU_DTYPE), b_col)

    return out[:, :Mp].reshape(Cout_pad, N, Hp, Wp)


def fc_chain(x, w1, b1, w2, b2, w3, b3):
    """x: (N, 400) f32.  Weights pre-transposed/padded: w1 (400,128), w2/w3 (128,128)."""
    N, D = x.shape
    tile_b = min(_round_up(N, 8), 256)
    n_pad = _round_up(N, tile_b)
    x = jnp.pad(x, ((0, n_pad - N), (0, 0))).astype(MXU_DTYPE)

    out = pl.pallas_call(
        _fc_chain_kernel,
        out_shape=jax.ShapeDtypeStruct((n_pad, 128), jnp.float32),
        grid=(n_pad // tile_b,),
        in_specs=[
            pl.BlockSpec((tile_b, D), lambda i: (i, 0)),
            pl.BlockSpec(w1.shape, lambda i: (0, 0)),
            pl.BlockSpec(b1.shape, lambda i: (0, 0)),
            pl.BlockSpec(w2.shape, lambda i: (0, 0)),
            pl.BlockSpec(b2.shape, lambda i: (0, 0)),
            pl.BlockSpec(w3.shape, lambda i: (0, 0)),
            pl.BlockSpec(b3.shape, lambda i: (0, 0)),
        ],
        out_specs=pl.BlockSpec((tile_b, 128), lambda i: (i, 0)),
        compiler_params=pltpu.CompilerParams(
            dimension_semantics=("parallel",),
            vmem_limit_bytes=_VMEM_LIMIT),
    )(x, w1.astype(MXU_DTYPE), b1, w2.astype(MXU_DTYPE), b2,
      w3.astype(MXU_DTYPE), b3)
    return out[:N]


# --------------------------------- params ---------------------------------- #

def init_params(key):
    """PyTorch-default-style U(-1/sqrt(fan_in), ...) init, then pre-packed ONCE
    into the padded / transposed layouts the kernels consume."""
    def uniform(k, shape, fan_in):
        bound = 1.0 / (fan_in ** 0.5)
        return jax.random.uniform(k, shape, jnp.float32, -bound, bound)

    ks = jax.random.split(key, 10)
    conv1_w = uniform(ks[0], (6, 1, 5, 5), 25)
    conv1_b = uniform(ks[1], (6,), 25)
    conv2_w = uniform(ks[2], (16, 6, 5, 5), 150)
    conv2_b = uniform(ks[3], (16,), 150)
    fc1_w = uniform(ks[4], (120, 400), 400)
    fc1_b = uniform(ks[5], (120,), 400)
    fc2_w = uniform(ks[6], (84, 120), 120)
    fc2_b = uniform(ks[7], (84,), 120)
    fc3_w = uniform(ks[8], (10, 84), 84)
    fc3_b = uniform(ks[9], (10,), 84)

    def pad_to(a, shape):
        return jnp.pad(a, [(0, t - s) for s, t in zip(a.shape, shape)])

    # conv1: Cout 6 -> 8 (zero channels); weight flattened to (Cout_pad, Cin*KH*KW).
    w1 = pad_to(conv1_w, (8, 1, 5, 5)).reshape(8, 25)
    b1 = pad_to(conv1_b, (8,)).reshape(8, 1)
    # conv2: Cin 6 -> 8 with zero rows (conv1's padded output channels are exact zeros).
    w2 = pad_to(conv2_w, (16, 8, 5, 5)).reshape(16, 200)
    b2 = conv2_b.reshape(16, 1)
    # FC weights stored transposed (K, Nout) with Nout zero-padded to 128 lanes.
    f1 = pad_to(fc1_w.T, (400, 128))
    f2 = pad_to(fc2_w.T, (128, 128))
    f3 = pad_to(fc3_w.T, (128, 128))
    g1 = pad_to(fc1_b, (128,)).reshape(1, 128)
    g2 = pad_to(fc2_b, (128,)).reshape(1, 128)
    g3 = pad_to(fc3_b, (128,)).reshape(1, 128)
    return {"conv1_w": w1, "conv1_b": b1, "conv2_w": w2, "conv2_b": b2,
            "fc1_w": f1, "fc1_b": g1, "fc2_w": f2, "fc2_b": g2,
            "fc3_w": f3, "fc3_b": g3}


# --------------------------------- forward ---------------------------------- #

def net_forward(params, x_nchw):
    N = x_nchw.shape[0]
    # NCHW -> CNHW (channel-first; the big N*H*W axis becomes the lane axis inside).
    x = jnp.transpose(x_nchw, (1, 0, 2, 3)).astype(jnp.float32)         # (1, N, 32, 32)
    x = conv_relu_pool(x, params["conv1_w"], params["conv1_b"], 5, 5)   # (8, N, 14, 14)
    x = conv_relu_pool(x, params["conv2_w"], params["conv2_b"], 5, 5)   # (16, N, 5, 5)
    # PyTorch flattens the NCHW tensor as (C, H, W) per sample.
    x = jnp.transpose(x, (1, 0, 2, 3)).reshape(N, 16 * 5 * 5)           # (N, 400)
    out = fc_chain(x, params["fc1_w"], params["fc1_b"],
                   params["fc2_w"], params["fc2_b"],
                   params["fc3_w"], params["fc3_b"])                    # (N, 128)
    return out[:, :10]


if __name__ == "__main__":
    key = jax.random.PRNGKey(0)
    k_param, k_x = jax.random.split(key)
    params = init_params(k_param)
    # LeNet expects 1x32x32 inputs so the conv/pool stack ends at 16x5x5.
    x = jax.random.normal(k_x, (2, 1, 32, 32), jnp.float32)  # NCHW, like PyTorch
    out = jax.jit(net_forward)(params, x)
    out = jax.block_until_ready(out)
    assert out.shape == (2, 10) and out.dtype == jnp.float32
    print("KERNEL_OK")
</pallas_src>

<mosaic_0001>
module attributes {stable_mosaic.version = 11 : i64} {
  func.func @_conv_pool_kernel(%arg0: i32, %arg1: memref<4x25x512xf32, #tpu.memory_space<vmem>>, %arg2: memref<8x25xf32, #tpu.memory_space<vmem>>, %arg3: memref<8x1xf32, #tpu.memory_space<vmem>>, %arg4: memref<8x512xf32, #tpu.memory_space<vmem>>) attributes {dimension_semantics = [#tpu.dimension_semantics<parallel>], iteration_bounds = array<i64: 1>, scalar_prefetch = 0 : i64, scratch_operands = 0 : i64, tpu.core_type = #tpu.core_type<tc>, window_params = [{transform_indices = @transform_0, window_bounds = array<i64: 4, 25, 512>}, {pipeline_mode = #tpu.pipeline_mode<synchronous>, transform_indices = @transform_1, window_bounds = array<i64: 8, 25>}, {pipeline_mode = #tpu.pipeline_mode<synchronous>, transform_indices = @transform_2, window_bounds = array<i64: 8, 1>}, {transform_indices = @transform_3, window_bounds = array<i64: 8, 512>}]} {
    %c0 = arith.constant 0 : index
    %c0_0 = arith.constant 0 : index
    %0 = vector.load %arg2[%c0, %c0_0] : memref<8x25xf32, #tpu.memory_space<vmem>>, vector<8x25xf32>
    %c0_1 = arith.constant 0 : index
    %c0_2 = arith.constant 0 : index
    %c0_3 = arith.constant 0 : index
    %1 = vector.load %arg1[%c0_1, %c0_2, %c0_3] : memref<4x25x512xf32, #tpu.memory_space<vmem>>, vector<1x25x512xf32>
    %2 = vector.shape_cast %1 : vector<1x25x512xf32> to vector<25x512xf32>
    %cst = arith.constant dense<0.000000e+00> : vector<8x512xf32>
    %3 = tpu.matmul %0, %2, %cst {dimension_numbers = #tpu.dot_dimension_numbers<[1], [0], [0], [1], [0, 0, 1, 1], [], []>} : vector<8x25xf32>, vector<25x512xf32>, vector<8x512xf32> -> vector<8x512xf32>
    %c1 = arith.constant 1 : index
    %c0_4 = arith.constant 0 : index
    %c0_5 = arith.constant 0 : index
    %4 = vector.load %arg1[%c1, %c0_4, %c0_5] : memref<4x25x512xf32, #tpu.memory_space<vmem>>, vector<1x25x512xf32>
    %5 = vector.shape_cast %4 : vector<1x25x512xf32> to vector<25x512xf32>
    %cst_6 = arith.constant dense<0.000000e+00> : vector<8x512xf32>
    %6 = tpu.matmul %0, %5, %cst_6 {dimension_numbers = #tpu.dot_dimension_numbers<[1], [0], [0], [1], [0, 0, 1, 1], [], []>} : vector<8x25xf32>, vector<25x512xf32>, vector<8x512xf32> -> vector<8x512xf32>
    %7 = arith.maximumf %3, %6 : vector<8x512xf32>
    %c2 = arith.constant 2 : index
    %c0_7 = arith.constant 0 : index
    %c0_8 = arith.constant 0 : index
    %8 = vector.load %arg1[%c2, %c0_7, %c0_8] : memref<4x25x512xf32, #tpu.memory_space<vmem>>, vector<1x25x512xf32>
    %9 = vector.shape_cast %8 : vector<1x25x512xf32> to vector<25x512xf32>
    %cst_9 = arith.constant dense<0.000000e+00> : vector<8x512xf32>
    %10 = tpu.matmul %0, %9, %cst_9 {dimension_numbers = #tpu.dot_dimension_numbers<[1], [0], [0], [1], [0, 0, 1, 1], [], []>} : vector<8x25xf32>, vector<25x512xf32>, vector<8x512xf32> -> vector<8x512xf32>
    %11 = arith.maximumf %7, %10 : vector<8x512xf32>
    %c3 = arith.constant 3 : index
    %c0_10 = arith.constant 0 : index
    %c0_11 = arith.constant 0 : index
    %12 = vector.load %arg1[%c3, %c0_10, %c0_11] : memref<4x25x512xf32, #tpu.memory_space<vmem>>, vector<1x25x512xf32>
    %13 = vector.shape_cast %12 : vector<1x25x512xf32> to vector<25x512xf32>
    %cst_12 = arith.constant dense<0.000000e+00> : vector<8x512xf32>
    %14 = tpu.matmul %0, %13, %cst_12 {dimension_numbers = #tpu.dot_dimension_numbers<[1], [0], [0], [1], [0, 0, 1, 1], [], []>} : vector<8x25xf32>, vector<25x512xf32>, vector<8x512xf32> -> vector<8x512xf32>
    %15 = arith.maximumf %11, %14 : vector<8x512xf32>
    %c0_13 = arith.constant 0 : index
    %c0_14 = arith.constant 0 : index
    %16 = vector.load %arg3[%c0_13, %c0_14] : memref<8x1xf32, #tpu.memory_space<vmem>>, vector<8x1xf32>
    %17 = vector.broadcast %16 : vector<8x1xf32> to vector<8x512xf32>
    %18 = arith.addf %15, %17 : vector<8x512xf32>
    %cst_15 = arith.constant 0.000000e+00 : f32
    %19 = vector.broadcast %cst_15 : f32 to vector<8x512xf32>
    %20 = arith.maximumf %18, %19 : vector<8x512xf32>
    %c0_16 = arith.constant 0 : index
    %c0_17 = arith.constant 0 : index
    %21 = vector.load %arg4[%c0_16, %c0_17] : memref<8x512xf32, #tpu.memory_space<vmem>>, vector<8x512xf32>
    tpu.vector_store %arg4[%c0_16, %c0_17], %20 {strides = array<i32>} : memref<8x512xf32, #tpu.memory_space<vmem>>, vector<8x512xf32>,
    return
  }
  func.func @transform_0(%arg0: i32) -> (i32, i32, i32) {
    %c0_i32 = arith.constant 0 : i32
    %c0_i32_0 = arith.constant 0 : i32
    %c0_i32_1 = arith.constant 0 : i32
    return %c0_i32, %c0_i32_0, %arg0 : i32, i32, i32
  }
  func.func @transform_1(%arg0: i32) -> (i32, i32) {
    %c0_i32 = arith.constant 0 : i32
    %c0_i32_0 = arith.constant 0 : i32
    %c0_i32_1 = arith.constant 0 : i32
    return %c0_i32, %c0_i32_0 : i32, i32
  }
  func.func @transform_2(%arg0: i32) -> (i32, i32) {
    %c0_i32 = arith.constant 0 : i32
    %c0_i32_0 = arith.constant 0 : i32
    %c0_i32_1 = arith.constant 0 : i32
    return %c0_i32, %c0_i32_0 : i32, i32
  }
  func.func @transform_3(%arg0: i32) -> (i32, i32) {
    %c0_i32 = arith.constant 0 : i32
    %c0_i32_0 = arith.constant 0 : i32
    return %c0_i32, %arg0 : i32, i32
  }
}

module attributes {stable_mosaic.version = 11 : i64} {
  func.func @_conv_pool_kernel(%arg0: i32, %arg1: memref<4x200x128xf32, #tpu.memory_space<vmem>>, %arg2: memref<16x200xf32, #tpu.memory_space<vmem>>, %arg3: memref<16x1xf32, #tpu.memory_space<vmem>>, %arg4: memref<16x128xf32, #tpu.memory_space<vmem>>) attributes {dimension_semantics = [#tpu.dimension_semantics<parallel>], iteration_bounds = array<i64: 1>, scalar_prefetch = 0 : i64, scratch_operands = 0 : i64, tpu.core_type = #tpu.core_type<tc>, window_params = [{transform_indices = @transform_0, window_bounds = array<i64: 4, 200, 128>}, {pipeline_mode = #tpu.pipeline_mode<synchronous>, transform_indices = @transform_1, window_bounds = array<i64: 16, 200>}, {pipeline_mode = #tpu.pipeline_mode<synchronous>, transform_indices = @transform_2, window_bounds = array<i64: 16, 1>}, {transform_indices = @transform_3, window_bounds = array<i64: 16, 128>}]} {
    %c0 = arith.constant 0 : index
    %c0_0 = arith.constant 0 : index
    %0 = vector.load %arg2[%c0, %c0_0] : memref<16x200xf32, #tpu.memory_space<vmem>>, vector<16x200xf32>
    %c0_1 = arith.constant 0 : index
    %c0_2 = arith.constant 0 : index
    %c0_3 = arith.constant 0 : index
    %1 = vector.load %arg1[%c0_1, %c0_2, %c0_3] : memref<4x200x128xf32, #tpu.memory_space<vmem>>, vector<1x200x128xf32>
    %2 = vector.shape_cast %1 : vector<1x200x128xf32> to vector<200x128xf32>
    %cst = arith.constant dense<0.000000e+00> : vector<16x128xf32>
    %3 = tpu.matmul %0, %2, %cst {dimension_numbers = #tpu.dot_dimension_numbers<[1], [0], [0], [1], [0, 0, 1, 1], [], []>} : vector<16x200xf32>, vector<200x128xf32>, vector<16x128xf32> -> vector<16x128xf32>
    %c1 = arith.constant 1 : index
    %c0_4 = arith.constant 0 : index
    %c0_5 = arith.constant 0 : index
    %4 = vector.load %arg1[%c1, %c0_4, %c0_5] : memref<4x200x128xf32, #tpu.memory_space<vmem>>, vector<1x200x128xf32>
    %5 = vector.shape_cast %4 : vector<1x200x128xf32> to vector<200x128xf32>
    %cst_6 = arith.constant dense<0.000000e+00> : vector<16x128xf32>
    %6 = tpu.matmul %0, %5, %cst_6 {dimension_numbers = #tpu.dot_dimension_numbers<[1], [0], [0], [1], [0, 0, 1, 1], [], []>} : vector<16x200xf32>, vector<200x128xf32>, vector<16x128xf32> -> vector<16x128xf32>
    %7 = arith.maximumf %3, %6 : vector<16x128xf32>
    %c2 = arith.constant 2 : index
    %c0_7 = arith.constant 0 : index
    %c0_8 = arith.constant 0 : index
    %8 = vector.load %arg1[%c2, %c0_7, %c0_8] : memref<4x200x128xf32, #tpu.memory_space<vmem>>, vector<1x200x128xf32>
    %9 = vector.shape_cast %8 : vector<1x200x128xf32> to vector<200x128xf32>
    %cst_9 = arith.constant dense<0.000000e+00> : vector<16x128xf32>
    %10 = tpu.matmul %0, %9, %cst_9 {dimension_numbers = #tpu.dot_dimension_numbers<[1], [0], [0], [1], [0, 0, 1, 1], [], []>} : vector<16x200xf32>, vector<200x128xf32>, vector<16x128xf32> -> vector<16x128xf32>
    %11 = arith.maximumf %7, %10 : vector<16x128xf32>
    %c3 = arith.constant 3 : index
    %c0_10 = arith.constant 0 : index
    %c0_11 = arith.constant 0 : index
    %12 = vector.load %arg1[%c3, %c0_10, %c0_11] : memref<4x200x128xf32, #tpu.memory_space<vmem>>, vector<1x200x128xf32>
    %13 = vector.shape_cast %12 : vector<1x200x128xf32> to vector<200x128xf32>
    %cst_12 = arith.constant dense<0.000000e+00> : vector<16x128xf32>
    %14 = tpu.matmul %0, %13, %cst_12 {dimension_numbers = #tpu.dot_dimension_numbers<[1], [0], [0], [1], [0, 0, 1, 1], [], []>} : vector<16x200xf32>, vector<200x128xf32>, vector<16x128xf32> -> vector<16x128xf32>
    %15 = arith.maximumf %11, %14 : vector<16x128xf32>
    %c0_13 = arith.constant 0 : index
    %c0_14 = arith.constant 0 : index
    %16 = vector.load %arg3[%c0_13, %c0_14] : memref<16x1xf32, #tpu.memory_space<vmem>>, vector<16x1xf32>
    %17 = vector.broadcast %16 : vector<16x1xf32> to vector<16x128xf32>
    %18 = arith.addf %15, %17 : vector<16x128xf32>
    %cst_15 = arith.constant 0.000000e+00 : f32
    %19 = vector.broadcast %cst_15 : f32 to vector<16x128xf32>
    %20 = arith.maximumf %18, %19 : vector<16x128xf32>
    %c0_16 = arith.constant 0 : index
    %c0_17 = arith.constant 0 : index
    %21 = vector.load %arg4[%c0_16, %c0_17] : memref<16x128xf32, #tpu.memory_space<vmem>>, vector<16x128xf32>
    tpu.vector_store %arg4[%c0_16, %c0_17], %20 {strides = array<i32>} : memref<16x128xf32, #tpu.memory_space<vmem>>, vector<16x128xf32>,
    return
  }
  func.func @transform_0(%arg0: i32) -> (i32, i32, i32) {
    %c0_i32 = arith.constant 0 : i32
    %c0_i32_0 = arith.constant 0 : i32
    %c0_i32_1 = arith.constant 0 : i32
    return %c0_i32, %c0_i32_0, %arg0 : i32, i32, i32
  }
  func.func @transform_1(%arg0: i32) -> (i32, i32) {
    %c0_i32 = arith.constant 0 : i32
    %c0_i32_0 = arith.constant 0 : i32
    %c0_i32_1 = arith.constant 0 : i32
    return %c0_i32, %c0_i32_0 : i32, i32
  }
  func.func @transform_2(%arg0: i32) -> (i32, i32) {
    %c0_i32 = arith.constant 0 : i32
    %c0_i32_0 = arith.constant 0 : i32
    %c0_i32_1 = arith.constant 0 : i32
    return %c0_i32, %c0_i32_0 : i32, i32
  }
  func.func @transform_3(%arg0: i32) -> (i32, i32) {
    %c0_i32 = arith.constant 0 : i32
    %c0_i32_0 = arith.constant 0 : i32
    return %c0_i32, %arg0 : i32, i32
  }
}

module attributes {stable_mosaic.version = 11 : i64} {
  func.func @_fc_chain_kernel(%arg0: i32, %arg1: memref<8x400xf32, #tpu.memory_space<vmem>>, %arg2: memref<400x128xf32, #tpu.memory_space<vmem>>, %arg3: memref<1x128xf32, #tpu.memory_space<vmem>>, %arg4: memref<128x128xf32, #tpu.memory_space<vmem>>, %arg5: memref<1x128xf32, #tpu.memory_space<vmem>>, %arg6: memref<128x128xf32, #tpu.memory_space<vmem>>, %arg7: memref<1x128xf32, #tpu.memory_space<vmem>>, %arg8: memref<8x128xf32, #tpu.memory_space<vmem>>) attributes {dimension_semantics = [#tpu.dimension_semantics<parallel>], iteration_bounds = array<i64: 1>, scalar_prefetch = 0 : i64, scratch_operands = 0 : i64, tpu.core_type = #tpu.core_type<tc>, window_params = [{transform_indices = @transform_0, window_bounds = array<i64: 8, 400>}, {pipeline_mode = #tpu.pipeline_mode<synchronous>, transform_indices = @transform_1, window_bounds = array<i64: 400, 128>}, {pipeline_mode = #tpu.pipeline_mode<synchronous>, transform_indices = @transform_2, window_bounds = array<i64: 1, 128>}, {pipeline_mode = #tpu.pipeline_mode<synchronous>, transform_indices = @transform_3, window_bounds = array<i64: 128, 128>}, {pipeline_mode = #tpu.pipeline_mode<synchronous>, transform_indices = @transform_4, window_bounds = array<i64: 1, 128>}, {pipeline_mode = #tpu.pipeline_mode<synchronous>, transform_indices = @transform_5, window_bounds = array<i64: 128, 128>}, {pipeline_mode = #tpu.pipeline_mode<synchronous>, transform_indices = @transform_6, window_bounds = array<i64: 1, 128>}, {transform_indices = @transform_7, window_bounds = array<i64: 8, 128>}]} {
    %c0 = arith.constant 0 : index
    %c0_0 = arith.constant 0 : index
    %0 = vector.load %arg1[%c0, %c0_0] : memref<8x400xf32, #tpu.memory_space<vmem>>, vector<8x400xf32>
    %c0_1 = arith.constant 0 : index
    %c0_2 = arith.constant 0 : index
    %1 = vector.load %arg2[%c0_1, %c0_2] : memref<400x128xf32, #tpu.memory_space<vmem>>, vector<400x128xf32>
    %cst = arith.constant dense<0.000000e+00> : vector<8x128xf32>
    %2 = tpu.matmul %0, %1, %cst {dimension_numbers = #tpu.dot_dimension_numbers<[1], [0], [0], [1], [0, 0, 1, 1], [], []>} : vector<8x400xf32>, vector<400x128xf32>, vector<8x128xf32> -> vector<8x128xf32>
    %c0_3 = arith.constant 0 : index
    %c0_4 = arith.constant 0 : index
    %3 = vector.load %arg3[%c0_3, %c0_4] : memref<1x128xf32, #tpu.memory_space<vmem>>, vector<1x128xf32>
    %4 = vector.broadcast %3 : vector<1x128xf32> to vector<8x128xf32>
    %5 = arith.addf %2, %4 : vector<8x128xf32>
    %cst_5 = arith.constant 0.000000e+00 : f32
    %6 = vector.broadcast %cst_5 : f32 to vector<8x128xf32>
    %7 = arith.maximumf %5, %6 : vector<8x128xf32>
    %c0_6 = arith.constant 0 : index
    %c0_7 = arith.constant 0 : index
    %8 = vector.load %arg4[%c0_6, %c0_7] : memref<128x128xf32, #tpu.memory_space<vmem>>, vector<128x128xf32>
    %cst_8 = arith.constant dense<0.000000e+00> : vector<8x128xf32>
    %9 = tpu.matmul %7, %8, %cst_8 {dimension_numbers = #tpu.dot_dimension_numbers<[1], [0], [0], [1], [0, 0, 1, 1], [], []>} : vector<8x128xf32>, vector<128x128xf32>, vector<8x128xf32> -> vector<8x128xf32>
    %c0_9 = arith.constant 0 : index
    %c0_10 = arith.constant 0 : index
    %10 = vector.load %arg5[%c0_9, %c0_10] : memref<1x128xf32, #tpu.memory_space<vmem>>, vector<1x128xf32>
    %11 = vector.broadcast %10 : vector<1x128xf32> to vector<8x128xf32>
    %12 = arith.addf %9, %11 : vector<8x128xf32>
    %cst_11 = arith.constant 0.000000e+00 : f32
    %13 = vector.broadcast %cst_11 : f32 to vector<8x128xf32>
    %14 = arith.maximumf %12, %13 : vector<8x128xf32>
    %c0_12 = arith.constant 0 : index
    %c0_13 = arith.constant 0 : index
    %15 = vector.load %arg6[%c0_12, %c0_13] : memref<128x128xf32, #tpu.memory_space<vmem>>, vector<128x128xf32>
    %cst_14 = arith.constant dense<0.000000e+00> : vector<8x128xf32>
    %16 = tpu.matmul %14, %15, %cst_14 {dimension_numbers = #tpu.dot_dimension_numbers<[1], [0], [0], [1], [0, 0, 1, 1], [], []>} : vector<8x128xf32>, vector<128x128xf32>, vector<8x128xf32> -> vector<8x128xf32>
    %c0_15 = arith.constant 0 : index
    %c0_16 = arith.constant 0 : index
    %17 = vector.load %arg7[%c0_15, %c0_16] : memref<1x128xf32, #tpu.memory_space<vmem>>, vector<1x128xf32>
    %18 = vector.broadcast %17 : vector<1x128xf32> to vector<8x128xf32>
    %19 = arith.addf %16, %18 : vector<8x128xf32>
    %c0_17 = arith.constant 0 : index
    %c0_18 = arith.constant 0 : index
    %20 = vector.load %arg8[%c0_17, %c0_18] : memref<8x128xf32, #tpu.memory_space<vmem>>, vector<8x128xf32>
    tpu.vector_store %arg8[%c0_17, %c0_18], %19 {strides = array<i32>} : memref<8x128xf32, #tpu.memory_space<vmem>>, vector<8x128xf32>,
    return
  }
  func.func @transform_0(%arg0: i32) -> (i32, i32) {
    %c0_i32 = arith.constant 0 : i32
    %c0_i32_0 = arith.constant 0 : i32
    return %arg0, %c0_i32 : i32, i32
  }
  func.func @transform_1(%arg0: i32) -> (i32, i32) {
    %c0_i32 = arith.constant 0 : i32
    %c0_i32_0 = arith.constant 0 : i32
    %c0_i32_1 = arith.constant 0 : i32
    return %c0_i32, %c0_i32_0 : i32, i32
  }
  func.func @transform_2(%arg0: i32) -> (i32, i32) {
    %c0_i32 = arith.constant 0 : i32
    %c0_i32_0 = arith.constant 0 : i32
    %c0_i32_1 = arith.constant 0 : i32
    return %c0_i32, %c0_i32_0 : i32, i32
  }
  func.func @transform_3(%arg0: i32) -> (i32, i32) {
    %c0_i32 = arith.constant 0 : i32
    %c0_i32_0 = arith.constant 0 : i32
    %c0_i32_1 = arith.constant 0 : i32
    return %c0_i32, %c0_i32_0 : i32, i32
  }
  func.func @transform_4(%arg0: i32) -> (i32, i32) {
    %c0_i32 = arith.constant 0 : i32
    %c0_i32_0 = arith.constant 0 : i32
    %c0_i32_1 = arith.constant 0 : i32
    return %c0_i32, %c0_i32_0 : i32, i32
  }
  func.func @transform_5(%arg0: i32) -> (i32, i32) {
    %c0_i32 = arith.constant 0 : i32
    %c0_i32_0 = arith.constant 0 : i32
    %c0_i32_1 = arith.constant 0 : i32
    return %c0_i32, %c0_i32_0 : i32, i32
  }
  func.func @transform_6(%arg0: i32) -> (i32, i32) {
    %c0_i32 = arith.constant 0 : i32
    %c0_i32_0 = arith.constant 0 : i32
    %c0_i32_1 = arith.constant 0 : i32
    return %c0_i32, %c0_i32_0 : i32, i32
  }
  func.func @transform_7(%arg0: i32) -> (i32, i32) {
    %c0_i32 = arith.constant 0 : i32
    %c0_i32_0 = arith.constant 0 : i32
    return %arg0, %c0_i32 : i32, i32
  }
}

</mosaic_0001>

<llo_original>
// kernel: net_forward.3
$region0: #{net_forward.3}
  #allocation0 [shape = 'u32[]', space=smem, size = 0x4, offset = 0x4, fixed_abs, tag = 'smem constant byte address 0x4 - core index']
  #allocation1 [shape = 'u32[72,128]{1,0:T(1,128)}', space=vmem, size = 0x9000, scoped, tag = 'internal scratch']
  %s0 = inlined_call_operand.vmem [shape: f32[4,25,512], index: 0, kind: input, shape index: {}]
  %s1 = inlined_call_operand.vmem [shape: f32[8,25], index: 1, kind: input, shape index: {}]
  %s2 = inlined_call_operand.vmem [shape: f32[8,1], index: 2, kind: input, shape index: {}]
  %s3 = inlined_call_operand.vmem [shape: f32[8,512], index: 3, kind: output, shape index: {}]
  %s4 = sld [smem:[#allocation0]]
  $region22: #{net_forward.3} parent=0
    _
  %s6 = ssub.s32 1, %s4
  %s7 = scalar_select 0, %s6, %s4
  // Predicated region
  $region2: #{net_forward.3} parent=0 // pred_check
    _
  $region3: #{net_forward.3} parent=0 // pred_check_branch
    %9 = sbr.rel (0) target = $region5
  $region4: #{net_forward.3} parent=0 // pred_region
    _
  $region5: #{net_forward.3} parent=0 // pred_fallthru
    _
  // Predicated region
  $region6: #{net_forward.3} parent=0 // pred_check
    _
  $region7: #{net_forward.3} parent=0 // pred_check_branch
    %11 = sbr.rel (0) target = $region9
  $region8: #{net_forward.3} parent=0 // pred_region
    _
  $region9: #{net_forward.3} parent=0 // pred_fallthru
    _
  // Predicated region
  $region10: #{net_forward.3} parent=0 // pred_check
    _
  $region11: #{net_forward.3} parent=0 // pred_check_branch
    %13 = sbr.rel (0) target = $region13
  $region12: #{net_forward.3} parent=0 // pred_region
    _
  $region13: #{net_forward.3} parent=0 // pred_fallthru
    _
  %v14 = vld [vmem:[%s1] sm:$0xff]
  %v15 = vld [vmem:[%s0] sm:$0xff]
  %v16 = vld [vmem:[%s0 + $0x8] sm:$0xff]
  %v17 = vld [vmem:[%s0 + $0x10] sm:$0xff]
  %v18 = vld [vmem:[%s0 + $0x18] sm:$0xff]
  %v19 = vld [vmem:[%s0 + $0x20] sm:$0xff]
  %v20 = vld [vmem:[%s0 + $0x28] sm:$0xff]
  %v21 = vld [vmem:[%s0 + $0x30] sm:$0xff]
  %v22 = vld [vmem:[%s0 + $0x38] sm:$0xff]
  %v23 = vld [vmem:[%s0 + $0x40] sm:$0xff]
  %v24 = vld [vmem:[%s0 + $0x48] sm:$0xff]
  %v25 = vld [vmem:[%s0 + $0x50] sm:$0xff]
  %v26 = vld [vmem:[%s0 + $0x58] sm:$0xff]
  %v27 = vld [vmem:[%s0 + $0x60] sm:$0x1]
  %v28 = vld [vmem:[%s0 + $0x68] sm:$0x1]
  %v29 = vld [vmem:[%s0 + $0x70] sm:$0x1]
  %v30 = vld [vmem:[%s0 + $0x78] sm:$0x1]
  %vm31 = vcmask 203776
  %v33 = vsel %vm31, %v14, 0
  %vm35 = vcmask 1040384
  %v37 = vsel %vm35, %v27, 0
  %v40 = vsel %vm35, %v28, 0
  %v43 = vsel %vm35, %v29, 0
  %v46 = vsel %vm35, %v30, 0
  %48 = vmatpush.msra.mxu0 0.0
  %49 = vmatpush.msra.mxu0 0.0
  %50 = vmatpush.msra.mxu0 0.0
  %51 = vmatpush.msra.mxu0 0.0
  %52 = vmatpush.msra.mxu0 0.0
  %53 = vmatpush.msra.mxu0 0.0
  %54 = vmatpush.msra.mxu0 0.0
  %55 = vmatpush.msra.mxu0 0.0
  %56 = vmatpush.msra.mxu0 0.0
  %57 = vmatpush.msra.mxu0 0.0
  %58 = vmatpush.msra.mxu0 0.0
  %59 = vmatpush.msra.mxu0 0.0
  %60 = vmatpush.msra.mxu0 %v37
  %61 = vmatpush.msra.mxu0 %v23
  %62 = vmatpush.msra.mxu0 %v19
  %63 = vmatpush.msra.mxu0 %v15
  %64 = vmatmul.f32.gmra.mxu0 %v33
  %v65 = vpop.f32.mrf.mxu0
  %v66 = vadd.f32 0.0, %v65
  %67 = vdwg.mxu0
  %68 = vmatpush.msra.mxu0 0.0
  %69 = vmatpush.msra.mxu0 0.0
  %70 = vmatpush.msra.mxu0 0.0
  %71 = vmatpush.msra.mxu0 0.0
  %72 = vmatpush.msra.mxu0 0.0
  %73 = vmatpush.msra.mxu0 0.0
  %74 = vmatpush.msra.mxu0 0.0
  %75 = vmatpush.msra.mxu0 0.0
  %76 = vmatpush.msra.mxu0 0.0
  %77 = vmatpush.msra.mxu0 0.0
  %78 = vmatpush.msra.mxu0 0.0
  %79 = vmatpush.msra.mxu0 0.0
  %80 = vmatpush.msra.mxu0 %v40
  %81 = vmatpush.msra.mxu0 %v24
  %82 = vmatpush.msra.mxu0 %v20
  %83 = vmatpush.msra.mxu0 %v16
  %84 = vmatmul.f32.gmra.mxu0 %v33
  %v85 = vpop.f32.mrf.mxu0
  %v86 = vadd.f32 0.0, %v85
  %87 = vdwg.mxu0
  %88 = vmatpush.msra.mxu0 0.0
  %89 = vmatpush.msra.mxu0 0.0
  %90 = vmatpush.msra.mxu0 0.0
  %91 = vmatpush.msra.mxu0 0.0
  %92 = vmatpush.msra.mxu0 0.0
  %93 = vmatpush.msra.mxu0 0.0
  %94 = vmatpush.msra.mxu0 0.0
  %95 = vmatpush.msra.mxu0 0.0
  %96 = vmatpush.msra.mxu0 0.0
  %97 = vmatpush.msra.mxu0 0.0
  %98 = vmatpush.msra.mxu0 0.0
  %99 = vmatpush.msra.mxu0 0.0
  %100 = vmatpush.msra.mxu0 %v43
  %101 = vmatpush.msra.mxu0 %v25
  %102 = vmatpush.msra.mxu0 %v21
  %103 = vmatpush.msra.mxu0 %v17
  %104 = vmatmul.f32.gmra.mxu0 %v33
  %v105 = vpop.f32.mrf.mxu0
  %v106 = vadd.f32 0.0, %v105
  %107 = vdwg.mxu0
  %108 = vmatpush.msra.mxu0 0.0
  %109 = vmatpush.msra.mxu0 0.0
  %110 = vmatpush.msra.mxu0 0.0
  %111 = vmatpush.msra.mxu0 0.0
  %112 = vmatpush.msra.mxu0 0.0
  %113 = vmatpush.msra.mxu0 0.0
  %114 = vmatpush.msra.mxu0 0.0
  %115 = vmatpush.msra.mxu0 0.0
  %116 = vmatpush.msra.mxu0 0.0
  %117 = vmatpush.msra.mxu0 0.0
  %118 = vmatpush.msra.mxu0 0.0
  %119 = vmatpush.msra.mxu0 0.0
  %120 = vmatpush.msra.mxu0 %v46
  %121 = vmatpush.msra.mxu0 %v26
  %122 = vmatpush.msra.mxu0 %v22
  %123 = vmatpush.msra.mxu0 %v18
  %124 = vmatmul.f32.gmra.mxu0 %v33
  %v125 = vpop.f32.mrf.mxu0
  %v126 = vadd.f32 0.0, %v125
  %127 = vdwg.mxu0
  %s128 = scalar_lea.vmem %s0, 128
  %v129 = vld [vmem:[%s128] sm:$0xff]
  %v130 = vld [vmem:[%s128 + $0x8] sm:$0xff]
  %v131 = vld [vmem:[%s128 + $0x10] sm:$0xff]
  %v132 = vld [vmem:[%s128 + $0x18] sm:$0xff]
  %v133 = vld [vmem:[%s128 + $0x20] sm:$0xff]
  %v134 = vld [vmem:[%s128 + $0x28] sm:$0xff]
  %v135 = vld [vmem:[%s128 + $0x30] sm:$0xff]
  %v136 = vld [vmem:[%s128 + $0x38] sm:$0xff]
  %v137 = vld [vmem:[%s128 + $0x40] sm:$0xff]
  %v138 = vld [vmem:[%s128 + $0x48] sm:$0xff]
  %v139 = vld [vmem:[%s128 + $0x50] sm:$0xff]
  %v140 = vld [vmem:[%s128 + $0x58] sm:$0xff]
  %v141 = vld [vmem:[%s128 + $0x60] sm:$0x1]
  %v142 = vld [vmem:[%s128 + $0x68] sm:$0x1]
  %v143 = vld [vmem:[%s128 + $0x70] sm:$0x1]
  %v144 = vld [vmem:[%s128 + $0x78] sm:$0x1]
  %v146 = vsel %vm35, %v141, 0
  %v149 = vsel %vm35, %v142, 0
  %v152 = vsel %vm35, %v143, 0
  %v155 = vsel %vm35, %v144, 0
  %157 = vmatpush.msra.mxu0 0.0
  %158 = vmatpush.msra.mxu0 0.0
  %159 = vmatpush.msra.mxu0 0.0
  %160 = vmatpush.msra.mxu0 0.0
  %161 = vmatpush.msra.mxu0 0.0
  %162 = vmatpush.msra.mxu0 0.0
  %163 = vmatpush.msra.mxu0 0.0
  %164 = vmatpush.msra.mxu0 0.0
  %165 = vmatpush.msra.mxu0 0.0
  %166 = vmatpush.msra.mxu0 0.0
  %167 = vmatpush.msra.mxu0 0.0
  %168 = vmatpush.msra.mxu0 0.0
  %169 = vmatpush.msra.mxu0 %v146
  %170 = vmatpush.msra.mxu0 %v137
  %171 = vmatpush.msra.mxu0 %v133
  %172 = vmatpush.msra.mxu0 %v129
  %173 = vmatmul.f32.gmra.mxu0 %v33
  %v174 = vpop.f32.mrf.mxu0
  %v175 = vadd.f32 0.0, %v174
  %176 = vdwg.mxu0
  %177 = vmatpush.msra.mxu0 0.0
  %178 = vmatpush.msra.mxu0 0.0
  %179 = vmatpush.msra.mxu0 0.0
  %180 = vmatpush.msra.mxu0 0.0
  %181 = vmatpush.msra.mxu0 0.0
  %182 = vmatpush.msra.mxu0 0.0
  %183 = vmatpush.msra.mxu0 0.0
  %184 = vmatpush.msra.mxu0 0.0
  %185 = vmatpush.msra.mxu0 0.0
  %186 = vmatpush.msra.mxu0 0.0
  %187 = vmatpush.msra.mxu0 0.0
  %188 = vmatpush.msra.mxu0 0.0
  %189 = vmatpush.msra.mxu0 %v149
  %190 = vmatpush.msra.mxu0 %v138
  %191 = vmatpush.msra.mxu0 %v134
  %192 = vmatpush.msra.mxu0 %v130
  %193 = vmatmul.f32.gmra.mxu0 %v33
  %v194 = vpop.f32.mrf.mxu0
  %v195 = vadd.f32 0.0, %v194
  %196 = vdwg.mxu0
  %197 = vmatpush.msra.mxu0 0.0
  %198 = vmatpush.msra.mxu0 0.0
  %199 = vmatpush.msra.mxu0 0.0
  %200 = vmatpush.msra.mxu0 0.0
  %201 = vmatpush.msra.mxu0 0.0
  %202 = vmatpush.msra.mxu0 0.0
  %203 = vmatpush.msra.mxu0 0.0
  %204 = vmatpush.msra.mxu0 0.0
  %205 = vmatpush.msra.mxu0 0.0
  %206 = vmatpush.msra.mxu0 0.0
  %207 = vmatpush.msra.mxu0 0.0
  %208 = vmatpush.msra.mxu0 0.0
  %209 = vmatpush.msra.mxu0 %v152
  %210 = vmatpush.msra.mxu0 %v139
  %211 = vmatpush.msra.mxu0 %v135
  %212 = vmatpush.msra.mxu0 %v131
  %213 = vmatmul.f32.gmra.mxu0 %v33
  %v214 = vpop.f32.mrf.mxu0
  %v215 = vadd.f32 0.0, %v214
  %216 = vdwg.mxu0
  %217 = vmatpush.msra.mxu0 0.0
  %218 = vmatpush.msra.mxu0 0.0
  %219 = vmatpush.msra.mxu0 0.0
  %220 = vmatpush.msra.mxu0 0.0
  %221 = vmatpush.msra.mxu0 0.0
  %222 = vmatpush.msra.mxu0 0.0
  %223 = vmatpush.msra.mxu0 0.0
  %224 = vmatpush.msra.mxu0 0.0
  %225 = vmatpush.msra.mxu0 0.0
  %226 = vmatpush.msra.mxu0 0.0
  %227 = vmatpush.msra.mxu0 0.0
  %228 = vmatpush.msra.mxu0 0.0
  %229 = vmatpush.msra.mxu0 %v155
  %230 = vmatpush.msra.mxu0 %v140
  %231 = vmatpush.msra.mxu0 %v136
  %232 = vmatpush.msra.mxu0 %v132
  %233 = vmatmul.f32.gmra.mxu0 %v33
  %v234 = vpop.f32.mrf.mxu0
  %v235 = vadd.f32 0.0, %v234
  %236 = vdwg.mxu0
  %v237 = vmax.f32 %v66, %v175
  %v238 = vmax.f32 %v86, %v195
  %v239 = vmax.f32 %v106, %v215
  %v240 = vmax.f32 %v126, %v235
  %s241 = scalar_lea.vmem %s0, 256
  %v242 = vld [vmem:[%s241] sm:$0xff]
  %v243 = vld [vmem:[%s241 + $0x8] sm:$0xff]
  %v244 = vld [vmem:[%s241 + $0x10] sm:$0xff]
  %v245 = vld [vmem:[%s241 + $0x18] sm:$0xff]
  %v246 = vld [vmem:[%s241 + $0x20] sm:$0xff]
  %v247 = vld [vmem:[%s241 + $0x28] sm:$0xff]
  %v248 = vld [vmem:[%s241 + $0x30] sm:$0xff]
  %v249 = vld [vmem:[%s241 + $0x38] sm:$0xff]
  %v250 = vld [vmem:[%s241 + $0x40] sm:$0xff]
  %v251 = vld [vmem:[%s241 + $0x48] sm:$0xff]
  %v252 = vld [vmem:[%s241 + $0x50] sm:$0xff]
  %v253 = vld [vmem:[%s241 + $0x58] sm:$0xff]
  %v254 = vld [vmem:[%s241 + $0x60] sm:$0x1]
  %v255 = vld [vmem:[%s241 + $0x68] sm:$0x1]
  %v256 = vld [vmem:[%s241 + $0x70] sm:$0x1]
  %v257 = vld [vmem:[%s241 + $0x78] sm:$0x1]
  %v259 = vsel %vm35, %v254, 0
  %v262 = vsel %vm35, %v255, 0
  %v265 = vsel %vm35, %v256, 0
  %v268 = vsel %vm35, %v257, 0
  %270 = vmatpush.msra.mxu0 0.0
  %271 = vmatpush.msra.mxu0 0.0
  %272 = vmatpush.msra.mxu0 0.0
  %273 = vmatpush.msra.mxu0 0.0
  %274 = vmatpush.msra.mxu0 0.0
  %275 = vmatpush.msra.mxu0 0.0
  %276 = vmatpush.msra.mxu0 0.0
  %277 = vmatpush.msra.mxu0 0.0
  %278 = vmatpush.msra.mxu0 0.0
  %279 = vmatpush.msra.mxu0 0.0
  %280 = vmatpush.msra.mxu0 0.0
  %281 = vmatpush.msra.mxu0 0.0
  %282 = vmatpush.msra.mxu0 %v259
  %283 = vmatpush.msra.mxu0 %v250
  %284 = vmatpush.msra.mxu0 %v246
  %285 = vmatpush.msra.mxu0 %v242
  %286 = vmatmul.f32.gmra.mxu0 %v33
  %v287 = vpop.f32.mrf.mxu0
  %v288 = vadd.f32 0.0, %v287
  %289 = vdwg.mxu0
  %290 = vmatpush.msra.mxu0 0.0
  %291 = vmatpush.msra.mxu0 0.0
  %292 = vmatpush.msra.mxu0 0.0
  %293 = vmatpush.msra.mxu0 0.0
  %294 = vmatpush.msra.mxu0 0.0
  %295 = vmatpush.msra.mxu0 0.0
  %296 = vmatpush.msra.mxu0 0.0
  %297 = vmatpush.msra.mxu0 0.0
  %298 = vmatpush.msra.mxu0 0.0
  %299 = vmatpush.msra.mxu0 0.0
  %300 = vmatpush.msra.mxu0 0.0
  %301 = vmatpush.msra.mxu0 0.0
  %302 = vmatpush.msra.mxu0 %v262
  %303 = vmatpush.msra.mxu0 %v251
  %304 = vmatpush.msra.mxu0 %v247
  %305 = vmatpush.msra.mxu0 %v243
  %306 = vmatmul.f32.gmra.mxu0 %v33
  %v307 = vpop.f32.mrf.mxu0
  %v308 = vadd.f32 0.0, %v307
  %309 = vdwg.mxu0
  %310 = vmatpush.msra.mxu0 0.0
  %311 = vmatpush.msra.mxu0 0.0
  %312 = vmatpush.msra.mxu0 0.0
  %313 = vmatpush.msra.mxu0 0.0
  %314 = vmatpush.msra.mxu0 0.0
  %315 = vmatpush.msra.mxu0 0.0
  %316 = vmatpush.msra.mxu0 0.0
  %317 = vmatpush.msra.mxu0 0.0
  %318 = vmatpush.msra.mxu0 0.0
  %319 = vmatpush.msra.mxu0 0.0
  %320 = vmatpush.msra.mxu0 0.0
  %321 = vmatpush.msra.mxu0 0.0
  %322 = vmatpush.msra.mxu0 %v265
  %323 = vmatpush.msra.mxu0 %v252
  %324 = vmatpush.msra.mxu0 %v248
  %325 = vmatpush.msra.mxu0 %v244
  %326 = vmatmul.f32.gmra.mxu0 %v33
  %v327 = vpop.f32.mrf.mxu0
  %v328 = vadd.f32 0.0, %v327
  %329 = vdwg.mxu0
  %330 = vmatpush.msra.mxu0 0.0
  %331 = vmatpush.msra.mxu0 0.0
  %332 = vmatpush.msra.mxu0 0.0
  %333 = vmatpush.msra.mxu0 0.0
  %334 = vmatpush.msra.mxu0 0.0
  %335 = vmatpush.msra.mxu0 0.0
  %336 = vmatpush.msra.mxu0 0.0
  %337 = vmatpush.msra.mxu0 0.0
  %338 = vmatpush.msra.mxu0 0.0
  %339 = vmatpush.msra.mxu0 0.0
  %340 = vmatpush.msra.mxu0 0.0
  %341 = vmatpush.msra.mxu0 0.0
  %342 = vmatpush.msra.mxu0 %v268
  %343 = vmatpush.msra.mxu0 %v253
  %344 = vmatpush.msra.mxu0 %v249
  %345 = vmatpush.msra.mxu0 %v245
  %346 = vmatmul.f32.gmra.mxu0 %v33
  %v347 = vpop.f32.mrf.mxu0
  %v348 = vadd.f32 0.0, %v347
  %349 = vdwg.mxu0
  %v350 = vmax.f32 %v237, %v288
  %v351 = vmax.f32 %v238, %v308
  %v352 = vmax.f32 %v239, %v328
  %v353 = vmax.f32 %v240, %v348
  %s354 = scalar_lea.vmem %s0, 384
  %v355 = vld [vmem:[%s354] sm:$0xff]
  %v356 = vld [vmem:[%s354 + $0x8] sm:$0xff]
  %v357 = vld [vmem:[%s354 + $0x10] sm:$0xff]
  %v358 = vld [vmem:[%s354 + $0x18] sm:$0xff]
  %v359 = vld [vmem:[%s354 + $0x20] sm:$0xff]
  %v360 = vld [vmem:[%s354 + $0x28] sm:$0xff]
  %v361 = vld [vmem:[%s354 + $0x30] sm:$0xff]
  %v362 = vld [vmem:[%s354 + $0x38] sm:$0xff]
  %v363 = vld [vmem:[%s354 + $0x40] sm:$0xff]
  %v364 = vld [vmem:[%s354 + $0x48] sm:$0xff]
  %v365 = vld [vmem:[%s354 + $0x50] sm:$0xff]
  %v366 = vld [vmem:[%s354 + $0x58] sm:$0xff]
  %v367 = vld [vmem:[%s354 + $0x60] sm:$0x1]
  %v368 = vld [vmem:[%s354 + $0x68] sm:$0x1]
  %v369 = vld [vmem:[%s354 + $0x70] sm:$0x1]
  %v370 = vld [vmem:[%s354 + $0x78] sm:$0x1]
  %v372 = vsel %vm35, %v367, 0
  %v375 = vsel %vm35, %v368, 0
  %v378 = vsel %vm35, %v369, 0
  %v381 = vsel %vm35, %v370, 0
  %383 = vmatpush.msra.mxu0 0.0
  %384 = vmatpush.msra.mxu0 0.0
  %385 = vmatpush.msra.mxu0 0.0
  %386 = vmatpush.msra.mxu0 0.0
  %387 = vmatpush.msra.mxu0 0.0
  %388 = vmatpush.msra.mxu0 0.0
  %389 = vmatpush.msra.mxu0 0.0
  %390 = vmatpush.msra.mxu0 0.0
  %391 = vmatpush.msra.mxu0 0.0
  %392 = vmatpush.msra.mxu0 0.0
  %393 = vmatpush.msra.mxu0 0.0
  %394 = vmatpush.msra.mxu0 0.0
  %395 = vmatpush.msra.mxu0 %v372
  %396 = vmatpush.msra.mxu0 %v363
  %397 = vmatpush.msra.mxu0 %v359
  %398 = vmatpush.msra.mxu0 %v355
  %399 = vmatmul.f32.gmra.mxu0 %v33
  %v400 = vpop.f32.mrf.mxu0
  %v401 = vadd.f32 0.0, %v400
  %402 = vdwg.mxu0
  %403 = vmatpush.msra.mxu0 0.0
  %404 = vmatpush.msra.mxu0 0.0
  %405 = vmatpush.msra.mxu0 0.0
  %406 = vmatpush.msra.mxu0 0.0
  %407 = vmatpush.msra.mxu0 0.0
  %408 = vmatpush.msra.mxu0 0.0
  %409 = vmatpush.msra.mxu0 0.0
  %410 = vmatpush.msra.mxu0 0.0
  %411 = vmatpush.msra.mxu0 0.0
  %412 = vmatpush.msra.mxu0 0.0
  %413 = vmatpush.msra.mxu0 0.0
  %414 = vmatpush.msra.mxu0 0.0
  %415 = vmatpush.msra.mxu0 %v375
  %416 = vmatpush.msra.mxu0 %v364
  %417 = vmatpush.msra.mxu0 %v360
  %418 = vmatpush.msra.mxu0 %v356
  %419 = vmatmul.f32.gmra.mxu0 %v33
  %v420 = vpop.f32.mrf.mxu0
  %v421 = vadd.f32 0.0, %v420
  %422 = vdwg.mxu0
  %423 = vmatpush.msra.mxu0 0.0
  %424 = vmatpush.msra.mxu0 0.0
  %425 = vmatpush.msra.mxu0 0.0
  %426 = vmatpush.msra.mxu0 0.0
  %427 = vmatpush.msra.mxu0 0.0
  %428 = vmatpush.msra.mxu0 0.0
  %429 = vmatpush.msra.mxu0 0.0
  %430 = vmatpush.msra.mxu0 0.0
  %431 = vmatpush.msra.mxu0 0.0
  %432 = vmatpush.msra.mxu0 0.0
  %433 = vmatpush.msra.mxu0 0.0
  %434 = vmatpush.msra.mxu0 0.0
  %435 = vmatpush.msra.mxu0 %v378
  %436 = vmatpush.msra.mxu0 %v365
  %437 = vmatpush.msra.mxu0 %v361
  %438 = vmatpush.msra.mxu0 %v357
  %439 = vmatmul.f32.gmra.mxu0 %v33
  %v440 = vpop.f32.mrf.mxu0
  %v441 = vadd.f32 0.0, %v440
  %442 = vdwg.mxu0
  %443 = vmatpush.msra.mxu0 0.0
  %444 = vmatpush.msra.mxu0 0.0
  %445 = vmatpush.msra.mxu0 0.0
  %446 = vmatpush.msra.mxu0 0.0
  %447 = vmatpush.msra.mxu0 0.0
  %448 = vmatpush.msra.mxu0 0.0
  %449 = vmatpush.msra.mxu0 0.0
  %450 = vmatpush.msra.mxu0 0.0
  %451 = vmatpush.msra.mxu0 0.0
  %452 = vmatpush.msra.mxu0 0.0
  %453 = vmatpush.msra.mxu0 0.0
  %454 = vmatpush.msra.mxu0 0.0
  %455 = vmatpush.msra.mxu0 %v381
  %456 = vmatpush.msra.mxu0 %v366
  %457 = vmatpush.msra.mxu0 %v362
  %458 = vmatpush.msra.mxu0 %v358
  %459 = vmatmul.f32.gmra.mxu0 %v33
  %v460 = vpop.f32.mrf.mxu0
  %v461 = vadd.f32 0.0, %v460
  %462 = vdwg.mxu0
  %v463 = vmax.f32 %v350, %v401
  %v464 = vmax.f32 %v351, %v421
  %v465 = vmax.f32 %v352, %v441
  %v466 = vmax.f32 %v353, %v461
  %v467 = vld [vmem:[%s2] sm:$0xff]
  %469 = vset.pattern.permute.xlu0 0
  %470 = vperm.xlu0 %469, %v467
  %v471 = vpop.permute.xlu0 %470
  %v473 = vadd.f32 %v463, %v471
  %v474 = vadd.f32 %v464, %v471
  %v475 = vadd.f32 %v465, %v471
  %v476 = vadd.f32 %v466, %v471
  %v477 = vmax.f32 %v473, 0.0
  %v478 = vmax.f32 %v474, 0.0
  %v479 = vmax.f32 %v475, 0.0
  %v480 = vmax.f32 %v476, 0.0
  %481 = vst [vmem:[%s3] sm:$0xff] %v477
  %482 = vst [vmem:[%s3 + $0x8] sm:$0xff] %v478
  %483 = vst [vmem:[%s3 + $0x10] sm:$0xff] %v479
  %484 = vst [vmem:[%s3 + $0x18] sm:$0xff] %v480
  // Predicated region
  $region14: #{net_forward.3} parent=0 // pred_check
    _
  $region15: #{net_forward.3} parent=0 // pred_check_branch
    %486 = sbr.rel (0) target = $region17
  $region16: #{net_forward.3} parent=0 // pred_region
    _
  $region17: #{net_forward.3} parent=0 // pred_fallthru
    _
  // Predicated region
  $region18: #{net_forward.3} parent=0 // pred_check
    _
  $region19: #{net_forward.3} parent=0 // pred_check_branch
    %488 = sbr.rel (0) target = $region21
  $region20: #{net_forward.3} parent=0 // pred_region
    _
  $region21: #{net_forward.3} parent=0 // pred_fallthru
    _

// kernel: net_forward.4
$region0: #{net_forward.4}
  #allocation0 [shape = 'u32[]', space=smem, size = 0x4, offset = 0x4, fixed_abs, tag = 'smem constant byte address 0x4 - core index']
  #allocation1 [shape = 'u32[72,128]{1,0:T(1,128)}', space=vmem, size = 0x9000, scoped, tag = 'internal scratch']
  %s0 = inlined_call_operand.vmem [shape: f32[4,200,128], index: 0, kind: input, shape index: {}]
  %s1 = inlined_call_operand.vmem [shape: f32[16,200], index: 1, kind: input, shape index: {}]
  %s2 = inlined_call_operand.vmem [shape: f32[16,1], index: 2, kind: input, shape index: {}]
  %s3 = inlined_call_operand.vmem [shape: f32[16,128], index: 3, kind: output, shape index: {}]
  %s4 = sld [smem:[#allocation0]]
  $region22: #{net_forward.4} parent=0
    _
  %s6 = ssub.s32 1, %s4
  %s7 = scalar_select 0, %s6, %s4
  // Predicated region
  $region2: #{net_forward.4} parent=0 // pred_check
    _
  $region3: #{net_forward.4} parent=0 // pred_check_branch
    %9 = sbr.rel (0) target = $region5
  $region4: #{net_forward.4} parent=0 // pred_region
    _
  $region5: #{net_forward.4} parent=0 // pred_fallthru
    _
  // Predicated region
  $region6: #{net_forward.4} parent=0 // pred_check
    _
  $region7: #{net_forward.4} parent=0 // pred_check_branch
    %11 = sbr.rel (0) target = $region9
  $region8: #{net_forward.4} parent=0 // pred_region
    _
  $region9: #{net_forward.4} parent=0 // pred_fallthru
    _
  // Predicated region
  $region10: #{net_forward.4} parent=0 // pred_check
    _
  $region11: #{net_forward.4} parent=0 // pred_check_branch
    %13 = sbr.rel (0) target = $region13
  $region12: #{net_forward.4} parent=0 // pred_region
    _
  $region13: #{net_forward.4} parent=0 // pred_fallthru
    _
  %v14 = vld [vmem:[%s1] sm:$0xff]
  %v15 = vld [vmem:[%s1 + $0x8] sm:$0xff]
  %v16 = vld [vmem:[%s1 + $0x10] sm:$0xff]
  %v17 = vld [vmem:[%s1 + $0x18] sm:$0xff]
  %v18 = vld [vmem:[%s0] sm:$0xff]
  %v19 = vld [vmem:[%s0 + $0x8] sm:$0xff]
  %v20 = vld [vmem:[%s0 + $0x10] sm:$0xff]
  %v21 = vld [vmem:[%s0 + $0x18] sm:$0xff]
  %v22 = vld [vmem:[%s0 + $0x20] sm:$0xff]
  %v23 = vld [vmem:[%s0 + $0x28] sm:$0xff]
  %v24 = vld [vmem:[%s0 + $0x30] sm:$0xff]
  %v25 = vld [vmem:[%s0 + $0x38] sm:$0xff]
  %v26 = vld [vmem:[%s0 + $0x40] sm:$0xff]
  %v27 = vld [vmem:[%s0 + $0x48] sm:$0xff]
  %v28 = vld [vmem:[%s0 + $0x50] sm:$0xff]
  %v29 = vld [vmem:[%s0 + $0x58] sm:$0xff]
  %v30 = vld [vmem:[%s0 + $0x60] sm:$0xff]
  %v31 = vld [vmem:[%s0 + $0x68] sm:$0xff]
  %v32 = vld [vmem:[%s0 + $0x70] sm:$0xff]
  %v33 = vld [vmem:[%s0 + $0x78] sm:$0xff]
  %v34 = vld [vmem:[%s0 + $0x80] sm:$0xff]
  %v35 = vld [vmem:[%s0 + $0x88] sm:$0xff]
  %v36 = vld [vmem:[%s0 + $0x90] sm:$0xff]
  %v37 = vld [vmem:[%s0 + $0x98] sm:$0xff]
  %v38 = vld [vmem:[%s0 + $0xa0] sm:$0xff]
  %v39 = vld [vmem:[%s0 + $0xa8] sm:$0xff]
  %v40 = vld [vmem:[%s0 + $0xb0] sm:$0xff]
  %v41 = vld [vmem:[%s0 + $0xb8] sm:$0xff]
  %v42 = vld [vmem:[%s0 + $0xc0] sm:$0xff]
  %vm43 = vcmask 588800
  %v45 = vsel %vm43, %v15, 0
  %v48 = vsel %vm43, %v17, 0
  %50 = vmatpush.msra.mxu0 %v33
  %51 = vmatpush.msra.mxu0 %v32
  %52 = vmatpush.msra.mxu0 %v31
  %53 = vmatpush.msra.mxu0 %v30
  %54 = vmatpush.msra.mxu0 %v29
  %55 = vmatpush.msra.mxu0 %v28
  %56 = vmatpush.msra.mxu0 %v27
  %57 = vmatpush.msra.mxu0 %v26
  %58 = vmatpush.msra.mxu0 %v25
  %59 = vmatpush.msra.mxu0 %v24
  %60 = vmatpush.msra.mxu0 %v23
  %61 = vmatpush.msra.mxu0 %v22
  %62 = vmatpush.msra.mxu0 %v21
  %63 = vmatpush.msra.mxu0 %v20
  %64 = vmatpush.msra.mxu0 %v19
  %65 = vmatpush.msra.mxu0 %v18
  %66 = vmatmul.f32.gmra.mxu0 %v14
  %v67 = vpop.f32.mrf.mxu0
  %v68 = vadd.f32 0.0, %v67
  %69 = vmatmul.f32.gmra.mxu0 %v16
  %v70 = vpop.f32.mrf.mxu0
  %v71 = vadd.f32 0.0, %v70
  %72 = vdwg.mxu0
  %73 = vmatpush.msra.mxu0 0.0
  %74 = vmatpush.msra.mxu0 0.0
  %75 = vmatpush.msra.mxu0 0.0
  %76 = vmatpush.msra.mxu0 0.0
  %77 = vmatpush.msra.mxu0 0.0
  %78 = vmatpush.msra.mxu0 0.0
  %79 = vmatpush.msra.mxu0 0.0
  %80 = vmatpush.msra.mxu0 %v42
  %81 = vmatpush.msra.mxu0 %v41
  %82 = vmatpush.msra.mxu0 %v40
  %83 = vmatpush.msra.mxu0 %v39
  %84 = vmatpush.msra.mxu0 %v38
  %85 = vmatpush.msra.mxu0 %v37
  %86 = vmatpush.msra.mxu0 %v36
  %87 = vmatpush.msra.mxu0 %v35
  %88 = vmatpush.msra.mxu0 %v34
  %89 = vmatmul.f32.gmra.mxu0 %v45
  %v90 = vpop.f32.mrf.mxu0
  %v91 = vadd.f32 %v68, %v90
  %92 = vmatmul.f32.gmra.mxu0 %v48
  %v93 = vpop.f32.mrf.mxu0
  %v94 = vadd.f32 %v71, %v93
  %95 = vdwg.mxu0
  %s96 = scalar_lea.vmem %s0, 200
  %v97 = vld [vmem:[%s96] sm:$0xff]
  %v98 = vld [vmem:[%s96 + $0x8] sm:$0xff]
  %v99 = vld [vmem:[%s96 + $0x10] sm:$0xff]
  %v100 = vld [vmem:[%s96 + $0x18] sm:$0xff]
  %v101 = vld [vmem:[%s96 + $0x20] sm:$0xff]
  %v102 = vld [vmem:[%s96 + $0x28] sm:$0xff]
  %v103 = vld [vmem:[%s96 + $0x30] sm:$0xff]
  %v104 = vld [vmem:[%s96 + $0x38] sm:$0xff]
  %v105 = vld [vmem:[%s96 + $0x40] sm:$0xff]
  %v106 = vld [vmem:[%s96 + $0x48] sm:$0xff]
  %v107 = vld [vmem:[%s96 + $0x50] sm:$0xff]
  %v108 = vld [vmem:[%s96 + $0x58] sm:$0xff]
  %v109 = vld [vmem:[%s96 + $0x60] sm:$0xff]
  %v110 = vld [vmem:[%s96 + $0x68] sm:$0xff]
  %v111 = vld [vmem:[%s96 + $0x70] sm:$0xff]
  %v112 = vld [vmem:[%s96 + $0x78] sm:$0xff]
  %v113 = vld [vmem:[%s96 + $0x80] sm:$0xff]
  %v114 = vld [vmem:[%s96 + $0x88] sm:$0xff]
  %v115 = vld [vmem:[%s96 + $0x90] sm:$0xff]
  %v116 = vld [vmem:[%s96 + $0x98] sm:$0xff]
  %v117 = vld [vmem:[%s96 + $0xa0] sm:$0xff]
  %v118 = vld [vmem:[%s96 + $0xa8] sm:$0xff]
  %v119 = vld [vmem:[%s96 + $0xb0] sm:$0xff]
  %v120 = vld [vmem:[%s96 + $0xb8] sm:$0xff]
  %v121 = vld [vmem:[%s96 + $0xc0] sm:$0xff]
  %122 = vmatpush.msra.mxu0 %v112
  %123 = vmatpush.msra.mxu0 %v111
  %124 = vmatpush.msra.mxu0 %v110
  %125 = vmatpush.msra.mxu0 %v109
  %126 = vmatpush.msra.mxu0 %v108
  %127 = vmatpush.msra.mxu0 %v107
  %128 = vmatpush.msra.mxu0 %v106
  %129 = vmatpush.msra.mxu0 %v105
  %130 = vmatpush.msra.mxu0 %v104
  %131 = vmatpush.msra.mxu0 %v103
  %132 = vmatpush.msra.mxu0 %v102
  %133 = vmatpush.msra.mxu0 %v101
  %134 = vmatpush.msra.mxu0 %v100
  %135 = vmatpush.msra.mxu0 %v99
  %136 = vmatpush.msra.mxu0 %v98
  %137 = vmatpush.msra.mxu0 %v97
  %138 = vmatmul.f32.gmra.mxu0 %v14
  %v139 = vpop.f32.mrf.mxu0
  %v140 = vadd.f32 0.0, %v139
  %141 = vmatmul.f32.gmra.mxu0 %v16
  %v142 = vpop.f32.mrf.mxu0
  %v143 = vadd.f32 0.0, %v142
  %144 = vdwg.mxu0
  %145 = vmatpush.msra.mxu0 0.0
  %146 = vmatpush.msra.mxu0 0.0
  %147 = vmatpush.msra.mxu0 0.0
  %148 = vmatpush.msra.mxu0 0.0
  %149 = vmatpush.msra.mxu0 0.0
  %150 = vmatpush.msra.mxu0 0.0
  %151 = vmatpush.msra.mxu0 0.0
  %152 = vmatpush.msra.mxu0 %v121
  %153 = vmatpush.msra.mxu0 %v120
  %154 = vmatpush.msra.mxu0 %v119
  %155 = vmatpush.msra.mxu0 %v118
  %156 = vmatpush.msra.mxu0 %v117
  %157 = vmatpush.msra.mxu0 %v116
  %158 = vmatpush.msra.mxu0 %v115
  %159 = vmatpush.msra.mxu0 %v114
  %160 = vmatpush.msra.mxu0 %v113
  %161 = vmatmul.f32.gmra.mxu0 %v45
  %v162 = vpop.f32.mrf.mxu0
  %v163 = vadd.f32 %v140, %v162
  %164 = vmatmul.f32.gmra.mxu0 %v48
  %v165 = vpop.f32.mrf.mxu0
  %v166 = vadd.f32 %v143, %v165
  %167 = vdwg.mxu0
  %v168 = vmax.f32 %v91, %v163
  %v169 = vmax.f32 %v94, %v166
  %s170 = scalar_lea.vmem %s0, 400
  %v171 = vld [vmem:[%s170] sm:$0xff]
  %v172 = vld [vmem:[%s170 + $0x8] sm:$0xff]
  %v173 = vld [vmem:[%s170 + $0x10] sm:$0xff]
  %v174 = vld [vmem:[%s170 + $0x18] sm:$0xff]
  %v175 = vld [vmem:[%s170 + $0x20] sm:$0xff]
  %v176 = vld [vmem:[%s170 + $0x28] sm:$0xff]
  %v177 = vld [vmem:[%s170 + $0x30] sm:$0xff]
  %v178 = vld [vmem:[%s170 + $0x38] sm:$0xff]
  %v179 = vld [vmem:[%s170 + $0x40] sm:$0xff]
  %v180 = vld [vmem:[%s170 + $0x48] sm:$0xff]
  %v181 = vld [vmem:[%s170 + $0x50] sm:$0xff]
  %v182 = vld [vmem:[%s170 + $0x58] sm:$0xff]
  %v183 = vld [vmem:[%s170 + $0x60] sm:$0xff]
  %v184 = vld [vmem:[%s170 + $0x68] sm:$0xff]
  %v185 = vld [vmem:[%s170 + $0x70] sm:$0xff]
  %v186 = vld [vmem:[%s170 + $0x78] sm:$0xff]
  %v187 = vld [vmem:[%s170 + $0x80] sm:$0xff]
  %v188 = vld [vmem:[%s170 + $0x88] sm:$0xff]
  %v189 = vld [vmem:[%s170 + $0x90] sm:$0xff]
  %v190 = vld [vmem:[%s170 + $0x98] sm:$0xff]
  %v191 = vld [vmem:[%s170 + $0xa0] sm:$0xff]
  %v192 = vld [vmem:[%s170 + $0xa8] sm:$0xff]
  %v193 = vld [vmem:[%s170 + $0xb0] sm:$0xff]
  %v194 = vld [vmem:[%s170 + $0xb8] sm:$0xff]
  %v195 = vld [vmem:[%s170 + $0xc0] sm:$0xff]
  %196 = vmatpush.msra.mxu0 %v186
  %197 = vmatpush.msra.mxu0 %v185
  %198 = vmatpush.msra.mxu0 %v184
  %199 = vmatpush.msra.mxu0 %v183
  %200 = vmatpush.msra.mxu0 %v182
  %201 = vmatpush.msra.mxu0 %v181
  %202 = vmatpush.msra.mxu0 %v180
  %203 = vmatpush.msra.mxu0 %v179
  %204 = vmatpush.msra.mxu0 %v178
  %205 = vmatpush.msra.mxu0 %v177
  %206 = vmatpush.msra.mxu0 %v176
  %207 = vmatpush.msra.mxu0 %v175
  %208 = vmatpush.msra.mxu0 %v174
  %209 = vmatpush.msra.mxu0 %v173
  %210 = vmatpush.msra.mxu0 %v172
  %211 = vmatpush.msra.mxu0 %v171
  %212 = vmatmul.f32.gmra.mxu0 %v14
  %v213 = vpop.f32.mrf.mxu0
  %v214 = vadd.f32 0.0, %v213
  %215 = vmatmul.f32.gmra.mxu0 %v16
  %v216 = vpop.f32.mrf.mxu0
  %v217 = vadd.f32 0.0, %v216
  %218 = vdwg.mxu0
  %219 = vmatpush.msra.mxu0 0.0
  %220 = vmatpush.msra.mxu0 0.0
  %221 = vmatpush.msra.mxu0 0.0
  %222 = vmatpush.msra.mxu0 0.0
  %223 = vmatpush.msra.mxu0 0.0
  %224 = vmatpush.msra.mxu0 0.0
  %225 = vmatpush.msra.mxu0 0.0
  %226 = vmatpush.msra.mxu0 %v195
  %227 = vmatpush.msra.mxu0 %v194
  %228 = vmatpush.msra.mxu0 %v193
  %229 = vmatpush.msra.mxu0 %v192
  %230 = vmatpush.msra.mxu0 %v191
  %231 = vmatpush.msra.mxu0 %v190
  %232 = vmatpush.msra.mxu0 %v189
  %233 = vmatpush.msra.mxu0 %v188
  %234 = vmatpush.msra.mxu0 %v187
  %235 = vmatmul.f32.gmra.mxu0 %v45
  %v236 = vpop.f32.mrf.mxu0
  %v237 = vadd.f32 %v214, %v236
  %238 = vmatmul.f32.gmra.mxu0 %v48
  %v239 = vpop.f32.mrf.mxu0
  %v240 = vadd.f32 %v217, %v239
  %241 = vdwg.mxu0
  %v242 = vmax.f32 %v168, %v237
  %v243 = vmax.f32 %v169, %v240
  %s244 = scalar_lea.vmem %s0, 600
  %v245 = vld [vmem:[%s244] sm:$0xff]
  %v246 = vld [vmem:[%s244 + $0x8] sm:$0xff]
  %v247 = vld [vmem:[%s244 + $0x10] sm:$0xff]
  %v248 = vld [vmem:[%s244 + $0x18] sm:$0xff]
  %v249 = vld [vmem:[%s244 + $0x20] sm:$0xff]
  %v250 = vld [vmem:[%s244 + $0x28] sm:$0xff]
  %v251 = vld [vmem:[%s244 + $0x30] sm:$0xff]
  %v252 = vld [vmem:[%s244 + $0x38] sm:$0xff]
  %v253 = vld [vmem:[%s244 + $0x40] sm:$0xff]
  %v254 = vld [vmem:[%s244 + $0x48] sm:$0xff]
  %v255 = vld [vmem:[%s244 + $0x50] sm:$0xff]
  %v256 = vld [vmem:[%s244 + $0x58] sm:$0xff]
  %v257 = vld [vmem:[%s244 + $0x60] sm:$0xff]
  %v258 = vld [vmem:[%s244 + $0x68] sm:$0xff]
  %v259 = vld [vmem:[%s244 + $0x70] sm:$0xff]
  %v260 = vld [vmem:[%s244 + $0x78] sm:$0xff]
  %v261 = vld [vmem:[%s244 + $0x80] sm:$0xff]
  %v262 = vld [vmem:[%s244 + $0x88] sm:$0xff]
  %v263 = vld [vmem:[%s244 + $0x90] sm:$0xff]
  %v264 = vld [vmem:[%s244 + $0x98] sm:$0xff]
  %v265 = vld [vmem:[%s244 + $0xa0] sm:$0xff]
  %v266 = vld [vmem:[%s244 + $0xa8] sm:$0xff]
  %v267 = vld [vmem:[%s244 + $0xb0] sm:$0xff]
  %v268 = vld [vmem:[%s244 + $0xb8] sm:$0xff]
  %v269 = vld [vmem:[%s244 + $0xc0] sm:$0xff]
  %270 = vmatpush.msra.mxu0 %v260
  %271 = vmatpush.msra.mxu0 %v259
  %272 = vmatpush.msra.mxu0 %v258
  %273 = vmatpush.msra.mxu0 %v257
  %274 = vmatpush.msra.mxu0 %v256
  %275 = vmatpush.msra.mxu0 %v255
  %276 = vmatpush.msra.mxu0 %v254
  %277 = vmatpush.msra.mxu0 %v253
  %278 = vmatpush.msra.mxu0 %v252
  %279 = vmatpush.msra.mxu0 %v251
  %280 = vmatpush.msra.mxu0 %v250
  %281 = vmatpush.msra.mxu0 %v249
  %282 = vmatpush.msra.mxu0 %v248
  %283 = vmatpush.msra.mxu0 %v247
  %284 = vmatpush.msra.mxu0 %v246
  %285 = vmatpush.msra.mxu0 %v245
  %286 = vmatmul.f32.gmra.mxu0 %v14
  %v287 = vpop.f32.mrf.mxu0
  %v288 = vadd.f32 0.0, %v287
  %289 = vmatmul.f32.gmra.mxu0 %v16
  %v290 = vpop.f32.mrf.mxu0
  %v291 = vadd.f32 0.0, %v290
  %292 = vdwg.mxu0
  %293 = vmatpush.msra.mxu0 0.0
  %294 = vmatpush.msra.mxu0 0.0
  %295 = vmatpush.msra.mxu0 0.0
  %296 = vmatpush.msra.mxu0 0.0
  %297 = vmatpush.msra.mxu0 0.0
  %298 = vmatpush.msra.mxu0 0.0
  %299 = vmatpush.msra.mxu0 0.0
  %300 = vmatpush.msra.mxu0 %v269
  %301 = vmatpush.msra.mxu0 %v268
  %302 = vmatpush.msra.mxu0 %v267
  %303 = vmatpush.msra.mxu0 %v266
  %304 = vmatpush.msra.mxu0 %v265
  %305 = vmatpush.msra.mxu0 %v264
  %306 = vmatpush.msra.mxu0 %v263
  %307 = vmatpush.msra.mxu0 %v262
  %308 = vmatpush.msra.mxu0 %v261
  %309 = vmatmul.f32.gmra.mxu0 %v45
  %v310 = vpop.f32.mrf.mxu0
  %v311 = vadd.f32 %v288, %v310
  %312 = vmatmul.f32.gmra.mxu0 %v48
  %v313 = vpop.f32.mrf.mxu0
  %v314 = vadd.f32 %v291, %v313
  %315 = vdwg.mxu0
  %v316 = vmax.f32 %v242, %v311
  %v317 = vmax.f32 %v243, %v314
  %v318 = vld [vmem:[%s2] sm:$0xff]
  %v319 = vld [vmem:[%s2 + $0x8] sm:$0xff]
  %321 = vset.pattern.permute.xlu0 0
  %322 = vperm.xlu0 %321, %v318
  %v323 = vpop.permute.xlu0 %322
  %326 = vset.pattern.permute.xlu0 0
  %327 = vperm.xlu0 %326, %v319
  %v328 = vpop.permute.xlu0 %327
  %v330 = vadd.f32 %v316, %v323
  %v331 = vadd.f32 %v317, %v328
  %v332 = vmax.f32 %v330, 0.0
  %v333 = vmax.f32 %v331, 0.0
  %334 = vst [vmem:[%s3] sm:$0xff] %v332
  %335 = vst [vmem:[%s3 + $0x8] sm:$0xff] %v333
  // Predicated region
  $region14: #{net_forward.4} parent=0 // pred_check
    _
  $region15: #{net_forward.4} parent=0 // pred_check_branch
    %337 = sbr.rel (0) target = $region17
  $region16: #{net_forward.4} parent=0 // pred_region
    _
  $region17: #{net_forward.4} parent=0 // pred_fallthru
    _
  // Predicated region
  $region18: #{net_forward.4} parent=0 // pred_check
    _
  $region19: #{net_forward.4} parent=0 // pred_check_branch
    %339 = sbr.rel (0) target = $region21
  $region20: #{net_forward.4} parent=0 // pred_region
    _
  $region21: #{net_forward.4} parent=0 // pred_fallthru
    _

// kernel: net_forward.5
$region0: #{net_forward.5}
  #allocation0 [shape = 'u32[]', space=smem, size = 0x4, offset = 0x4, fixed_abs, tag = 'smem constant byte address 0x4 - core index']
  #allocation1 [shape = 'u32[72,128]{1,0:T(1,128)}', space=vmem, size = 0x9000, scoped, tag = 'internal scratch']
  %s0 = inlined_call_operand.vmem [shape: f32[8,400], index: 0, kind: input, shape index: {}]
  %s1 = inlined_call_operand.vmem [shape: f32[400,128], index: 1, kind: input, shape index: {}]
  %s2 = inlined_call_operand.vmem [shape: f32[1,128], index: 2, kind: input, shape index: {}]
  %s3 = inlined_call_operand.vmem [shape: f32[128,128], index: 3, kind: input, shape index: {}]
  %s4 = inlined_call_operand.vmem [shape: f32[1,128], index: 4, kind: input, shape index: {}]
  %s5 = inlined_call_operand.vmem [shape: f32[128,128], index: 5, kind: input, shape index: {}]
  %s6 = inlined_call_operand.vmem [shape: f32[1,128], index: 6, kind: input, shape index: {}]
  %s7 = inlined_call_operand.vmem [shape: f32[8,128], index: 7, kind: output, shape index: {}]
  %s8 = sld [smem:[#allocation0]]
  $region38: #{net_forward.5} parent=0
    _
  %s10 = ssub.s32 1, %s8
  %s11 = scalar_select 0, %s10, %s8
  // Predicated region
  $region2: #{net_forward.5} parent=0 // pred_check
    _
  $region3: #{net_forward.5} parent=0 // pred_check_branch
    %13 = sbr.rel (0) target = $region5
  $region4: #{net_forward.5} parent=0 // pred_region
    _
  $region5: #{net_forward.5} parent=0 // pred_fallthru
    _
  // Predicated region
  $region6: #{net_forward.5} parent=0 // pred_check
    _
  $region7: #{net_forward.5} parent=0 // pred_check_branch
    %15 = sbr.rel (0) target = $region9
  $region8: #{net_forward.5} parent=0 // pred_region
    _
  $region9: #{net_forward.5} parent=0 // pred_fallthru
    _
  // Predicated region
  $region10: #{net_forward.5} parent=0 // pred_check
    _
  $region11: #{net_forward.5} parent=0 // pred_check_branch
    %17 = sbr.rel (0) target = $region13
  $region12: #{net_forward.5} parent=0 // pred_region
    _
  $region13: #{net_forward.5} parent=0 // pred_fallthru
    _
  // Predicated region
  $region14: #{net_forward.5} parent=0 // pred_check
    _
  $region15: #{net_forward.5} parent=0 // pred_check_branch
    %19 = sbr.rel (0) target = $region17
  $region16: #{net_forward.5} parent=0 // pred_region
    _
  $region17: #{net_forward.5} parent=0 // pred_fallthru
    _
  // Predicated region
  $region18: #{net_forward.5} parent=0 // pred_check
    _
  $region19: #{net_forward.5} parent=0 // pred_check_branch
    %21 = sbr.rel (0) target = $region21
  $region20: #{net_forward.5} parent=0 // pred_region
    _
  $region21: #{net_forward.5} parent=0 // pred_fallthru
    _
  // Predicated region
  $region22: #{net_forward.5} parent=0 // pred_check
    _
  $region23: #{net_forward.5} parent=0 // pred_check_branch
    %23 = sbr.rel (0) target = $region25
  $region24: #{net_forward.5} parent=0 // pred_region
    _
  $region25: #{net_forward.5} parent=0 // pred_fallthru
    _
  // Predicated region
  $region26: #{net_forward.5} parent=0 // pred_check
    _
  $region27: #{net_forward.5} parent=0 // pred_check_branch
    %25 = sbr.rel (0) target = $region29
  $region28: #{net_forward.5} parent=0 // pred_region
    _
  $region29: #{net_forward.5} parent=0 // pred_fallthru
    _
  %v26 = vld [vmem:[%s0] sm:$0xff]
  %v27 = vld [vmem:[%s0 + $0x8] sm:$0xff]
  %v28 = vld [vmem:[%s0 + $0x10] sm:$0xff]
  %v29 = vld [vmem:[%s0 + $0x18] sm:$0xff]
  %v30 = vld [vmem:[%s1] sm:$0xff]
  %v31 = vld [vmem:[%s1 + $0x8] sm:$0xff]
  %v32 = vld [vmem:[%s1 + $0x10] sm:$0xff]
  %v33 = vld [vmem:[%s1 + $0x18] sm:$0xff]
  %v34 = vld [vmem:[%s1 + $0x20] sm:$0xff]
  %v35 = vld [vmem:[%s1 + $0x28] sm:$0xff]
  %v36 = vld [vmem:[%s1 + $0x30] sm:$0xff]
  %v37 = vld [vmem:[%s1 + $0x38] sm:$0xff]
  %v38 = vld [vmem:[%s1 + $0x40] sm:$0xff]
  %v39 = vld [vmem:[%s1 + $0x48] sm:$0xff]
  %v40 = vld [vmem:[%s1 + $0x50] sm:$0xff]
  %v41 = vld [vmem:[%s1 + $0x58] sm:$0xff]
  %v42 = vld [vmem:[%s1 + $0x60] sm:$0xff]
  %v43 = vld [vmem:[%s1 + $0x68] sm:$0xff]
  %v44 = vld [vmem:[%s1 + $0x70] sm:$0xff]
  %v45 = vld [vmem:[%s1 + $0x78] sm:$0xff]
  %v46 = vld [vmem:[%s1 + $0x80] sm:$0xff]
  %v47 = vld [vmem:[%s1 + $0x88] sm:$0xff]
  %v48 = vld [vmem:[%s1 + $0x90] sm:$0xff]
  %v49 = vld [vmem:[%s1 + $0x98] sm:$0xff]
  %v50 = vld [vmem:[%s1 + $0xa0] sm:$0xff]
  %v51 = vld [vmem:[%s1 + $0xa8] sm:$0xff]
  %v52 = vld [vmem:[%s1 + $0xb0] sm:$0xff]
  %v53 = vld [vmem:[%s1 + $0xb8] sm:$0xff]
  %v54 = vld [vmem:[%s1 + $0xc0] sm:$0xff]
  %v55 = vld [vmem:[%s1 + $0xc8] sm:$0xff]
  %v56 = vld [vmem:[%s1 + $0xd0] sm:$0xff]
  %v57 = vld [vmem:[%s1 + $0xd8] sm:$0xff]
  %v58 = vld [vmem:[%s1 + $0xe0] sm:$0xff]
  %v59 = vld [vmem:[%s1 + $0xe8] sm:$0xff]
  %v60 = vld [vmem:[%s1 + $0xf0] sm:$0xff]
  %v61 = vld [vmem:[%s1 + $0xf8] sm:$0xff]
  %v62 = vld [vmem:[%s1 + $0x100] sm:$0xff]
  %v63 = vld [vmem:[%s1 + $0x108] sm:$0xff]
  %v64 = vld [vmem:[%s1 + $0x110] sm:$0xff]
  %v65 = vld [vmem:[%s1 + $0x118] sm:$0xff]
  %v66 = vld [vmem:[%s1 + $0x120] sm:$0xff]
  %v67 = vld [vmem:[%s1 + $0x128] sm:$0xff]
  %v68 = vld [vmem:[%s1 + $0x130] sm:$0xff]
  %v69 = vld [vmem:[%s1 + $0x138] sm:$0xff]
  %v70 = vld [vmem:[%s1 + $0x140] sm:$0xff]
  %v71 = vld [vmem:[%s1 + $0x148] sm:$0xff]
  %v72 = vld [vmem:[%s1 + $0x150] sm:$0xff]
  %v73 = vld [vmem:[%s1 + $0x158] sm:$0xff]
  %v74 = vld [vmem:[%s1 + $0x160] sm:$0xff]
  %v75 = vld [vmem:[%s1 + $0x168] sm:$0xff]
  %v76 = vld [vmem:[%s1 + $0x170] sm:$0xff]
  %v77 = vld [vmem:[%s1 + $0x178] sm:$0xff]
  %v78 = vld [vmem:[%s1 + $0x180] sm:$0xff]
  %v79 = vld [vmem:[%s1 + $0x188] sm:$0xff]
  %v80 = vld [vmem:[%s2] sm:$0x1]
  %v82 = vperm.slane %v80, 0
  %vm84 = vcmask 130048
  %v86 = vsel %vm84, %v29, 0
  %88 = vmatpush.msra.mxu0 %v45
  %89 = vmatpush.msra.mxu0 %v44
  %90 = vmatpush.msra.mxu0 %v43
  %91 = vmatpush.msra.mxu0 %v42
  %92 = vmatpush.msra.mxu0 %v41
  %93 = vmatpush.msra.mxu0 %v40
  %94 = vmatpush.msra.mxu0 %v39
  %95 = vmatpush.msra.mxu0 %v38
  %96 = vmatpush.msra.mxu0 %v37
  %97 = vmatpush.msra.mxu0 %v36
  %98 = vmatpush.msra.mxu0 %v35
  %99 = vmatpush.msra.mxu0 %v34
  %100 = vmatpush.msra.mxu0 %v33
  %101 = vmatpush.msra.mxu0 %v32
  %102 = vmatpush.msra.mxu0 %v31
  %103 = vmatpush.msra.mxu0 %v30
  %104 = vmatmul.f32.gmra.mxu0 %v26
  %v105 = vpop.f32.mrf.mxu0
  %v106 = vadd.f32 %v82, %v105
  %107 = vdwg.mxu0
  %108 = vmatpush.msra.mxu0 %v61
  %109 = vmatpush.msra.mxu0 %v60
  %110 = vmatpush.msra.mxu0 %v59
  %111 = vmatpush.msra.mxu0 %v58
  %112 = vmatpush.msra.mxu0 %v57
  %113 = vmatpush.msra.mxu0 %v56
  %114 = vmatpush.msra.mxu0 %v55
  %115 = vmatpush.msra.mxu0 %v54
  %116 = vmatpush.msra.mxu0 %v53
  %117 = vmatpush.msra.mxu0 %v52
  %118 = vmatpush.msra.mxu0 %v51
  %119 = vmatpush.msra.mxu0 %v50
  %120 = vmatpush.msra.mxu0 %v49
  %121 = vmatpush.msra.mxu0 %v48
  %122 = vmatpush.msra.mxu0 %v47
  %123 = vmatpush.msra.mxu0 %v46
  %124 = vmatmul.f32.gmra.mxu0 %v27
  %v125 = vpop.f32.mrf.mxu0
  %v126 = vadd.f32 %v106, %v125
  %127 = vdwg.mxu0
  %128 = vmatpush.msra.mxu0 %v77
  %129 = vmatpush.msra.mxu0 %v76
  %130 = vmatpush.msra.mxu0 %v75
  %131 = vmatpush.msra.mxu0 %v74
  %132 = vmatpush.msra.mxu0 %v73
  %133 = vmatpush.msra.mxu0 %v72
  %134 = vmatpush.msra.mxu0 %v71
  %135 = vmatpush.msra.mxu0 %v70
  %136 = vmatpush.msra.mxu0 %v69
  %137 = vmatpush.msra.mxu0 %v68
  %138 = vmatpush.msra.mxu0 %v67
  %139 = vmatpush.msra.mxu0 %v66
  %140 = vmatpush.msra.mxu0 %v65
  %141 = vmatpush.msra.mxu0 %v64
  %142 = vmatpush.msra.mxu0 %v63
  %143 = vmatpush.msra.mxu0 %v62
  %144 = vmatmul.f32.gmra.mxu0 %v28
  %v145 = vpop.f32.mrf.mxu0
  %v146 = vadd.f32 %v126, %v145
  %147 = vdwg.mxu0
  %148 = vmatpush.msra.mxu0 0.0
  %149 = vmatpush.msra.mxu0 0.0
  %150 = vmatpush.msra.mxu0 0.0
  %151 = vmatpush.msra.mxu0 0.0
  %152 = vmatpush.msra.mxu0 0.0
  %153 = vmatpush.msra.mxu0 0.0
  %154 = vmatpush.msra.mxu0 0.0
  %155 = vmatpush.msra.mxu0 0.0
  %156 = vmatpush.msra.mxu0 0.0
  %157 = vmatpush.msra.mxu0 0.0
  %158 = vmatpush.msra.mxu0 0.0
  %159 = vmatpush.msra.mxu0 0.0
  %160 = vmatpush.msra.mxu0 0.0
  %161 = vmatpush.msra.mxu0 0.0
  %162 = vmatpush.msra.mxu0 %v79
  %163 = vmatpush.msra.mxu0 %v78
  %164 = vmatmul.f32.gmra.mxu0 %v86
  %v165 = vpop.f32.mrf.mxu0
  %v166 = vadd.f32 %v146, %v165
  %167 = vdwg.mxu0
  %v168 = vmax.f32 %v166, 0.0
  %v169 = vld [vmem:[%s3] sm:$0xff]
  %v170 = vld [vmem:[%s3 + $0x8] sm:$0xff]
  %v171 = vld [vmem:[%s3 + $0x10] sm:$0xff]
  %v172 = vld [vmem:[%s3 + $0x18] sm:$0xff]
  %v173 = vld [vmem:[%s3 + $0x20] sm:$0xff]
  %v174 = vld [vmem:[%s3 + $0x28] sm:$0xff]
  %v175 = vld [vmem:[%s3 + $0x30] sm:$0xff]
  %v176 = vld [vmem:[%s3 + $0x38] sm:$0xff]
  %v177 = vld [vmem:[%s3 + $0x40] sm:$0xff]
  %v178 = vld [vmem:[%s3 + $0x48] sm:$0xff]
  %v179 = vld [vmem:[%s3 + $0x50] sm:$0xff]
  %v180 = vld [vmem:[%s3 + $0x58] sm:$0xff]
  %v181 = vld [vmem:[%s3 + $0x60] sm:$0xff]
  %v182 = vld [vmem:[%s3 + $0x68] sm:$0xff]
  %v183 = vld [vmem:[%s3 + $0x70] sm:$0xff]
  %v184 = vld [vmem:[%s3 + $0x78] sm:$0xff]
  %v185 = vld [vmem:[%s4] sm:$0x1]
  %v187 = vperm.slane %v185, 0
  %189 = vmatpush.msra.mxu0 %v184
  %190 = vmatpush.msra.mxu0 %v183
  %191 = vmatpush.msra.mxu0 %v182
  %192 = vmatpush.msra.mxu0 %v181
  %193 = vmatpush.msra.mxu0 %v180
  %194 = vmatpush.msra.mxu0 %v179
  %195 = vmatpush.msra.mxu0 %v178
  %196 = vmatpush.msra.mxu0 %v177
  %197 = vmatpush.msra.mxu0 %v176
  %198 = vmatpush.msra.mxu0 %v175
  %199 = vmatpush.msra.mxu0 %v174
  %200 = vmatpush.msra.mxu0 %v173
  %201 = vmatpush.msra.mxu0 %v172
  %202 = vmatpush.msra.mxu0 %v171
  %203 = vmatpush.msra.mxu0 %v170
  %204 = vmatpush.msra.mxu0 %v169
  %205 = vmatmul.f32.gmra.mxu0 %v168
  %v206 = vpop.f32.mrf.mxu0
  %v207 = vadd.f32 %v187, %v206
  %208 = vdwg.mxu0
  %v209 = vmax.f32 %v207, 0.0
  %v210 = vld [vmem:[%s5] sm:$0xff]
  %v211 = vld [vmem:[%s5 + $0x8] sm:$0xff]
  %v212 = vld [vmem:[%s5 + $0x10] sm:$0xff]
  %v213 = vld [vmem:[%s5 + $0x18] sm:$0xff]
  %v214 = vld [vmem:[%s5 + $0x20] sm:$0xff]
  %v215 = vld [vmem:[%s5 + $0x28] sm:$0xff]
  %v216 = vld [vmem:[%s5 + $0x30] sm:$0xff]
  %v217 = vld [vmem:[%s5 + $0x38] sm:$0xff]
  %v218 = vld [vmem:[%s5 + $0x40] sm:$0xff]
  %v219 = vld [vmem:[%s5 + $0x48] sm:$0xff]
  %v220 = vld [vmem:[%s5 + $0x50] sm:$0xff]
  %v221 = vld [vmem:[%s5 + $0x58] sm:$0xff]
  %v222 = vld [vmem:[%s5 + $0x60] sm:$0xff]
  %v223 = vld [vmem:[%s5 + $0x68] sm:$0xff]
  %v224 = vld [vmem:[%s5 + $0x70] sm:$0xff]
  %v225 = vld [vmem:[%s5 + $0x78] sm:$0xff]
  %v226 = vld [vmem:[%s6] sm:$0x1]
  %v228 = vperm.slane %v226, 0
  %230 = vmatpush.msra.mxu0 %v225
  %231 = vmatpush.msra.mxu0 %v224
  %232 = vmatpush.msra.mxu0 %v223
  %233 = vmatpush.msra.mxu0 %v222
  %234 = vmatpush.msra.mxu0 %v221
  %235 = vmatpush.msra.mxu0 %v220
  %236 = vmatpush.msra.mxu0 %v219
  %237 = vmatpush.msra.mxu0 %v218
  %238 = vmatpush.msra.mxu0 %v217
  %239 = vmatpush.msra.mxu0 %v216
  %240 = vmatpush.msra.mxu0 %v215
  %241 = vmatpush.msra.mxu0 %v214
  %242 = vmatpush.msra.mxu0 %v213
  %243 = vmatpush.msra.mxu0 %v212
  %244 = vmatpush.msra.mxu0 %v211
  %245 = vmatpush.msra.mxu0 %v210
  %246 = vmatmul.f32.gmra.mxu0 %v209
  %v247 = vpop.f32.mrf.mxu0
  %v248 = vadd.f32 %v228, %v247
  %249 = vdwg.mxu0
  %250 = vst [vmem:[%s7] sm:$0xff] %v248
  // Predicated region
  $region30: #{net_forward.5} parent=0 // pred_check
    _
  $region31: #{net_forward.5} parent=0 // pred_check_branch
    %252 = sbr.rel (0) target = $region33
  $region32: #{net_forward.5} parent=0 // pred_region
    _
  $region33: #{net_forward.5} parent=0 // pred_fallthru
    _
  // Predicated region
  $region34: #{net_forward.5} parent=0 // pred_check
    _
  $region35: #{net_forward.5} parent=0 // pred_check_branch
    %254 = sbr.rel (0) target = $region37
  $region36: #{net_forward.5} parent=0 // pred_region
    _
  $region37: #{net_forward.5} parent=0 // pred_fallthru
    _

</llo_original>
